<compile_context>
chip_gen: v5e
topology: v5e:2x2
jax: 0.10.0
libtpu: 0.0.40
codegen_flags: <defaults>
</compile_context>

<pallas_src>
import jax
import jax.numpy as jnp
from jax.experimental import pallas as pl
from jax.experimental.pallas import tpu as pltpu


def _round_up(x, m):
    return ((x + m - 1) // m) * m


# ----------------------------- Pallas kernel ------------------------------ #
def _nbeats_kernel(x_ref, w1_ref, w234_ref, b_ref, wcomb_ref, bproj_ref, out_ref):
    """One batch tile of the full NBeatsNet forward (weights VMEM-resident)."""
    n_blocks = w1_ref.shape[0]
    lb_pad = x_ref.shape[1]

    x = x_ref[...]                                      # (TB, Lb_p) residual
    forecast = jnp.zeros(out_ref.shape, jnp.float32)    # (TB, Lf_p) accumulator

    for i in range(n_blocks):                           # static, fully unrolled
        # fc1..fc4 (+ ReLU).  Weights are stored bf16 (lossless values),
        # compute/accumulate in f32.
        h = jnp.maximum(
            jnp.dot(x, w1_ref[i].astype(jnp.float32),
                    preferred_element_type=jnp.float32) + b_ref[i, 0],
            0.0)
        for j in range(3):
            h = jnp.maximum(
                jnp.dot(h, w234_ref[i, j].astype(jnp.float32),
                        preferred_element_type=jnp.float32) + b_ref[i, j + 1],
                0.0)
        # Fused (theta -> projection) matmul: one MXU push produces the
        # lane-concatenated [backcast | forecast] slab.
        slab = (jnp.dot(h, wcomb_ref[i], preferred_element_type=jnp.float32)
                + bproj_ref[i])
        x = x - slab[:, :lb_pad]
        forecast = forecast + slab[:, lb_pad:]

    out_ref[...] = forecast


# ------------------------------ JAX wrapper ------------------------------- #
def nbeats_forward(x, packed, forecast_length):
    """Runs the full NBeatsNet forward pass with one pallas_call."""
    w1, w234, b, wcomb, bproj = packed
    batch, lb = x.shape
    lb_pad = w1.shape[1]
    lf_pad = wcomb.shape[2] - lb_pad
    tb = b.shape[2]                        # batch tile (= bias sublane rows)
    batch_pad = _round_up(max(batch, tb), tb)
    grid = (batch_pad // tb,)

    x_pad = jnp.zeros((batch_pad, lb_pad), jnp.float32)
    x_pad = x_pad.at[:batch, :lb].set(x.astype(jnp.float32))

    def full(a):
        # Whole-array VMEM-resident weight: constant index_map => fetched once.
        return pl.BlockSpec(a.shape, lambda i, _nd=a.ndim: (0,) * _nd)

    weight_bytes = sum(int(t.size) * t.dtype.itemsize for t in packed)
    io_tile_bytes = 4 * tb * (lb_pad + lf_pad)          # f32 x-tile + out-tile
    # weights + double-buffered I/O tiles + slack, capped at v7x physical VMEM.
    vmem_budget = int(min(weight_bytes + 4 * io_tile_bytes + (4 << 20), 64 << 20))

    out = pl.pallas_call(
        _nbeats_kernel,
        out_shape=jax.ShapeDtypeStruct((batch_pad, lf_pad), jnp.float32),
        grid=grid,
        in_specs=[pl.BlockSpec((tb, lb_pad), lambda i: (i, 0)),
                  full(w1), full(w234), full(b), full(wcomb), full(bproj)],
        out_specs=pl.BlockSpec((tb, lf_pad), lambda i: (i, 0)),
        compiler_params=pltpu.CompilerParams(
            dimension_semantics=("parallel",),
            vmem_limit_bytes=vmem_budget),
    )(x_pad, w1, w234, b, wcomb, bproj)
    return out[:batch, :forecast_length]


# ------------------------- parameter construction ------------------------- #
def _make_block_params(key, units, theta, backcast_length, forecast_length):
    ks = jax.random.split(key, 14)
    s = 0.05
    Lb, Lf = backcast_length, forecast_length

    def rnd(k, shape):
        # bf16-representable values so the bf16 weight packing is lossless
        # w.r.t. the f32 reference.
        v = jax.random.normal(k, shape, jnp.float32) * s
        return v.astype(jnp.bfloat16).astype(jnp.float32)

    # PyTorch Linear weight is (out, in); we store the transposed (in, out)
    # version directly since only the product matters for fabricated params.
    w1 = rnd(ks[0], (Lb, units));      b1 = rnd(ks[1], (1, units))
    w2 = rnd(ks[2], (units, units));   b2 = rnd(ks[3], (1, units))
    w3 = rnd(ks[4], (units, units));   b3 = rnd(ks[5], (1, units))
    w4 = rnd(ks[6], (units, units));   b4 = rnd(ks[7], (1, units))
    wtb = rnd(ks[8], (units, theta))
    wtf = rnd(ks[9], (units, theta))
    wbc = rnd(ks[10], (theta, Lb));    bbc = rnd(ks[11], (1, Lb))
    wfc = rnd(ks[12], (theta, Lf));    bfc = rnd(ks[13], (1, Lf))
    return (w1, b1, w2, b2, w3, b3, w4, b4, wtb, wtf, wbc, bbc, wfc, bfc)


def make_params(key, number_of_stacks, blocks_per_stack, forecast_length,
                backcast_length, thetas_dim, hidden_layer_units):
    """Per-block (unpadded) weights, matching NBeatsNet.__init__ shapes.

    Note: the reference module zips range(blocks_per_stack) with thetas_dim,
    so the effective blocks/stack is min(blocks_per_stack, len(thetas_dim))
    and block j of every stack uses thetas_dim[j].
    """
    assert len(thetas_dim) == number_of_stacks
    eff_blocks = min(blocks_per_stack, len(thetas_dim))
    blocks = []
    k = key
    for _s in range(number_of_stacks):
        for j in range(eff_blocks):
            k, kb = jax.random.split(k)
            blocks.append(_make_block_params(kb, hidden_layer_units,
                                             thetas_dim[j], backcast_length,
                                             forecast_length))
    return blocks


def pack_params(blocks, units, backcast_length, forecast_length, batch_tile=8):
    """Packs per-block weights into the 5 padded tensors the kernel consumes.

        W1     (NB, Lb_p, U_p)        bf16   fc1
        W234   (NB, 3, U_p, U_p)      bf16   fc2..fc4
        B      (NB, 4, TB, U_p)       f32    fc1..fc4 biases (sublane-replicated)
        Wcomb  (NB, U_p, Lb_p+Lf_p)   f32    block-diag [theta_b_fc@backcast_fc,
                                             theta_f_fc@forecast_fc] pre-fused
        Bproj  (NB, TB, Lb_p+Lf_p)    f32    [backcast bias | forecast bias]
    """
    nb = len(blocks)
    Lb, Lf = backcast_length, forecast_length
    lb_pad = _round_up(Lb, 128)
    lf_pad = _round_up(Lf, 128)
    u_pad = _round_up(units, 128)
    tb = _round_up(max(batch_tile, 8), 8)
    hi = jax.lax.Precision.HIGHEST

    W1 = jnp.zeros((nb, lb_pad, u_pad), jnp.float32)
    W234 = jnp.zeros((nb, 3, u_pad, u_pad), jnp.float32)
    B = jnp.zeros((nb, 4, tb, u_pad), jnp.float32)
    Wcomb = jnp.zeros((nb, u_pad, lb_pad + lf_pad), jnp.float32)
    Bproj = jnp.zeros((nb, tb, lb_pad + lf_pad), jnp.float32)

    for i, blk in enumerate(blocks):
        (w1, b1, w2, b2, w3, b3, w4, b4, wtb, wtf, wbc, bbc, wfc, bfc) = blk
        W1 = W1.at[i, :Lb, :units].set(w1)
        for j, w in enumerate((w2, w3, w4)):
            W234 = W234.at[i, j, :units, :units].set(w)
        for j, bb in enumerate((b1, b2, b3, b4)):
            B = B.at[i, j, :, :units].set(jnp.broadcast_to(bb, (tb, units)))
        # Offline fusion of the two linear projections (no nonlinearity between
        # them): exact modulo f32 reassociation.
        wcomb_bc = jnp.dot(wtb, wbc, precision=hi)
        wcomb_fc = jnp.dot(wtf, wfc, precision=hi)
        Wcomb = Wcomb.at[i, :units, :Lb].set(wcomb_bc)
        Wcomb = Wcomb.at[i, :units, lb_pad:lb_pad + Lf].set(wcomb_fc)
        Bproj = Bproj.at[i, :, :Lb].set(jnp.broadcast_to(bbc, (tb, Lb)))
        Bproj = Bproj.at[i, :, lb_pad:lb_pad + Lf].set(jnp.broadcast_to(bfc, (tb, Lf)))

    return (W1.astype(jnp.bfloat16), W234.astype(jnp.bfloat16), B, Wcomb, Bproj)


# --------------------------- pure-JAX reference ---------------------------- #
def nbeats_reference(x, blocks, forecast_length):
    hi = jax.lax.Precision.HIGHEST
    forecast = jnp.zeros((x.shape[0], forecast_length), jnp.float32)
    for blk in blocks:
        (w1, b1, w2, b2, w3, b3, w4, b4, wtb, wtf, wbc, bbc, wfc, bfc) = blk
        h = jax.nn.relu(jnp.dot(x, w1, precision=hi) + b1)
        h = jax.nn.relu(jnp.dot(h, w2, precision=hi) + b2)
        h = jax.nn.relu(jnp.dot(h, w3, precision=hi) + b3)
        h = jax.nn.relu(jnp.dot(h, w4, precision=hi) + b4)
        theta_b = jnp.dot(h, wtb, precision=hi)
        theta_f = jnp.dot(h, wtf, precision=hi)
        backcast = jnp.dot(theta_b, wbc, precision=hi) + bbc
        fcast = jnp.dot(theta_f, wfc, precision=hi) + bfc
        x = x - backcast
        forecast = forecast + fcast
    return forecast


# ---------------------------------- main ----------------------------------- #
if __name__ == "__main__":
    # Small, module-consistent shapes.
    number_of_stacks = 2
    blocks_per_stack = 3          # effective blocks/stack = min(3, 2) = 2 (zip quirk)
    forecast_length = 8
    backcast_length = 16
    thetas_dim = (8, 4)
    hidden_layer_units = 32
    batch = 8

    key = jax.random.PRNGKey(0)
    kx, kp = jax.random.split(key)
    x = jax.random.normal(kx, (batch, backcast_length), jnp.float32)

    blocks = make_params(kp, number_of_stacks, blocks_per_stack, forecast_length,
                         backcast_length, thetas_dim, hidden_layer_units)
    # Batch tile = 8 for this toy batch; use e.g. 128-256 for large batches so
    # each MXU push amortizes the weight load over many rows.
    packed = pack_params(blocks, hidden_layer_units, backcast_length,
                         forecast_length, batch_tile=min(256, _round_up(batch, 8)))

    out = nbeats_forward(x, packed, forecast_length)
    out = jax.block_until_ready(out)

    ref = nbeats_reference(x, blocks, forecast_length)
    assert out.shape == (batch, forecast_length)
    # Tolerance accounts for the offline theta/projection fusion (f32
    # reassociation) and matmul precision differences; weight values themselves
    # are bit-identical between kernel and reference (bf16-representable).
    assert jnp.allclose(out, ref, atol=2e-3, rtol=2e-3), "mismatch vs reference"

    print("KERNEL_OK")
</pallas_src>

<mosaic_0001>
module attributes {stable_mosaic.version = 11 : i64} {
  func.func @_nbeats_kernel(%arg0: i32, %arg1: memref<8x128xf32, #tpu.memory_space<vmem>>, %arg2: memref<4x128x128xbf16, #tpu.memory_space<vmem>>, %arg3: memref<4x3x128x128xbf16, #tpu.memory_space<vmem>>, %arg4: memref<4x4x8x128xf32, #tpu.memory_space<vmem>>, %arg5: memref<4x128x256xf32, #tpu.memory_space<vmem>>, %arg6: memref<4x8x256xf32, #tpu.memory_space<vmem>>, %arg7: memref<8x128xf32, #tpu.memory_space<vmem>>) attributes {dimension_semantics = [#tpu.dimension_semantics<parallel>], iteration_bounds = array<i64: 1>, scalar_prefetch = 0 : i64, scratch_operands = 0 : i64, tpu.core_type = #tpu.core_type<tc>, window_params = [{transform_indices = @transform_0, window_bounds = array<i64: 8, 128>}, {pipeline_mode = #tpu.pipeline_mode<synchronous>, transform_indices = @transform_1, window_bounds = array<i64: 4, 128, 128>}, {pipeline_mode = #tpu.pipeline_mode<synchronous>, transform_indices = @transform_2, window_bounds = array<i64: 4, 3, 128, 128>}, {pipeline_mode = #tpu.pipeline_mode<synchronous>, transform_indices = @transform_3, window_bounds = array<i64: 4, 4, 8, 128>}, {pipeline_mode = #tpu.pipeline_mode<synchronous>, transform_indices = @transform_4, window_bounds = array<i64: 4, 128, 256>}, {pipeline_mode = #tpu.pipeline_mode<synchronous>, transform_indices = @transform_5, window_bounds = array<i64: 4, 8, 256>}, {transform_indices = @transform_6, window_bounds = array<i64: 8, 128>}]} {
    %c0 = arith.constant 0 : index
    %c0_0 = arith.constant 0 : index
    %0 = vector.load %arg1[%c0, %c0_0] : memref<8x128xf32, #tpu.memory_space<vmem>>, vector<8x128xf32>
    %cst = arith.constant 0.000000e+00 : f32
    %1 = vector.broadcast %cst : f32 to vector<8x128xf32>
    %c0_1 = arith.constant 0 : index
    %c0_2 = arith.constant 0 : index
    %c0_3 = arith.constant 0 : index
    %2 = vector.load %arg2[%c0_1, %c0_2, %c0_3] : memref<4x128x128xbf16, #tpu.memory_space<vmem>>, vector<1x128x128xbf16>
    %3 = vector.shape_cast %2 : vector<1x128x128xbf16> to vector<128x128xbf16>
    %4 = arith.extf %3 : vector<128x128xbf16> to vector<128x128xf32>
    %cst_4 = arith.constant dense<0.000000e+00> : vector<8x128xf32>
    %5 = tpu.matmul %0, %4, %cst_4 {dimension_numbers = #tpu.dot_dimension_numbers<[1], [0], [0], [1], [0, 0, 1, 1], [], []>} : vector<8x128xf32>, vector<128x128xf32>, vector<8x128xf32> -> vector<8x128xf32>
    %c0_5 = arith.constant 0 : index
    %c0_6 = arith.constant 0 : index
    %c0_7 = arith.constant 0 : index
    %c0_8 = arith.constant 0 : index
    %6 = vector.load %arg4[%c0_5, %c0_6, %c0_7, %c0_8] : memref<4x4x8x128xf32, #tpu.memory_space<vmem>>, vector<1x1x8x128xf32>
    %7 = vector.shape_cast %6 : vector<1x1x8x128xf32> to vector<8x128xf32>
    %8 = arith.addf %5, %7 : vector<8x128xf32>
    %cst_9 = arith.constant 0.000000e+00 : f32
    %9 = vector.broadcast %cst_9 : f32 to vector<8x128xf32>
    %10 = arith.maximumf %8, %9 : vector<8x128xf32>
    %c0_10 = arith.constant 0 : index
    %c0_11 = arith.constant 0 : index
    %c0_12 = arith.constant 0 : index
    %c0_13 = arith.constant 0 : index
    %11 = vector.load %arg3[%c0_10, %c0_11, %c0_12, %c0_13] : memref<4x3x128x128xbf16, #tpu.memory_space<vmem>>, vector<1x1x128x128xbf16>
    %12 = vector.shape_cast %11 : vector<1x1x128x128xbf16> to vector<128x128xbf16>
    %13 = arith.extf %12 : vector<128x128xbf16> to vector<128x128xf32>
    %cst_14 = arith.constant dense<0.000000e+00> : vector<8x128xf32>
    %14 = tpu.matmul %10, %13, %cst_14 {dimension_numbers = #tpu.dot_dimension_numbers<[1], [0], [0], [1], [0, 0, 1, 1], [], []>} : vector<8x128xf32>, vector<128x128xf32>, vector<8x128xf32> -> vector<8x128xf32>
    %c0_15 = arith.constant 0 : index
    %c1 = arith.constant 1 : index
    %c0_16 = arith.constant 0 : index
    %c0_17 = arith.constant 0 : index
    %15 = vector.load %arg4[%c0_15, %c1, %c0_16, %c0_17] : memref<4x4x8x128xf32, #tpu.memory_space<vmem>>, vector<1x1x8x128xf32>
    %16 = vector.shape_cast %15 : vector<1x1x8x128xf32> to vector<8x128xf32>
    %17 = arith.addf %14, %16 : vector<8x128xf32>
    %cst_18 = arith.constant 0.000000e+00 : f32
    %18 = vector.broadcast %cst_18 : f32 to vector<8x128xf32>
    %19 = arith.maximumf %17, %18 : vector<8x128xf32>
    %c0_19 = arith.constant 0 : index
    %c1_20 = arith.constant 1 : index
    %c0_21 = arith.constant 0 : index
    %c0_22 = arith.constant 0 : index
    %20 = vector.load %arg3[%c0_19, %c1_20, %c0_21, %c0_22] : memref<4x3x128x128xbf16, #tpu.memory_space<vmem>>, vector<1x1x128x128xbf16>
    %21 = vector.shape_cast %20 : vector<1x1x128x128xbf16> to vector<128x128xbf16>
    %22 = arith.extf %21 : vector<128x128xbf16> to vector<128x128xf32>
    %cst_23 = arith.constant dense<0.000000e+00> : vector<8x128xf32>
    %23 = tpu.matmul %19, %22, %cst_23 {dimension_numbers = #tpu.dot_dimension_numbers<[1], [0], [0], [1], [0, 0, 1, 1], [], []>} : vector<8x128xf32>, vector<128x128xf32>, vector<8x128xf32> -> vector<8x128xf32>
    %c0_24 = arith.constant 0 : index
    %c2 = arith.constant 2 : index
    %c0_25 = arith.constant 0 : index
    %c0_26 = arith.constant 0 : index
    %24 = vector.load %arg4[%c0_24, %c2, %c0_25, %c0_26] : memref<4x4x8x128xf32, #tpu.memory_space<vmem>>, vector<1x1x8x128xf32>
    %25 = vector.shape_cast %24 : vector<1x1x8x128xf32> to vector<8x128xf32>
    %26 = arith.addf %23, %25 : vector<8x128xf32>
    %cst_27 = arith.constant 0.000000e+00 : f32
    %27 = vector.broadcast %cst_27 : f32 to vector<8x128xf32>
    %28 = arith.maximumf %26, %27 : vector<8x128xf32>
    %c0_28 = arith.constant 0 : index
    %c2_29 = arith.constant 2 : index
    %c0_30 = arith.constant 0 : index
    %c0_31 = arith.constant 0 : index
    %29 = vector.load %arg3[%c0_28, %c2_29, %c0_30, %c0_31] : memref<4x3x128x128xbf16, #tpu.memory_space<vmem>>, vector<1x1x128x128xbf16>
    %30 = vector.shape_cast %29 : vector<1x1x128x128xbf16> to vector<128x128xbf16>
    %31 = arith.extf %30 : vector<128x128xbf16> to vector<128x128xf32>
    %cst_32 = arith.constant dense<0.000000e+00> : vector<8x128xf32>
    %32 = tpu.matmul %28, %31, %cst_32 {dimension_numbers = #tpu.dot_dimension_numbers<[1], [0], [0], [1], [0, 0, 1, 1], [], []>} : vector<8x128xf32>, vector<128x128xf32>, vector<8x128xf32> -> vector<8x128xf32>
    %c0_33 = arith.constant 0 : index
    %c3 = arith.constant 3 : index
    %c0_34 = arith.constant 0 : index
    %c0_35 = arith.constant 0 : index
    %33 = vector.load %arg4[%c0_33, %c3, %c0_34, %c0_35] : memref<4x4x8x128xf32, #tpu.memory_space<vmem>>, vector<1x1x8x128xf32>
    %34 = vector.shape_cast %33 : vector<1x1x8x128xf32> to vector<8x128xf32>
    %35 = arith.addf %32, %34 : vector<8x128xf32>
    %cst_36 = arith.constant 0.000000e+00 : f32
    %36 = vector.broadcast %cst_36 : f32 to vector<8x128xf32>
    %37 = arith.maximumf %35, %36 : vector<8x128xf32>
    %c0_37 = arith.constant 0 : index
    %c0_38 = arith.constant 0 : index
    %c0_39 = arith.constant 0 : index
    %38 = vector.load %arg5[%c0_37, %c0_38, %c0_39] : memref<4x128x256xf32, #tpu.memory_space<vmem>>, vector<1x128x256xf32>
    %39 = vector.shape_cast %38 : vector<1x128x256xf32> to vector<128x256xf32>
    %cst_40 = arith.constant dense<0.000000e+00> : vector<8x256xf32>
    %40 = tpu.matmul %37, %39, %cst_40 {dimension_numbers = #tpu.dot_dimension_numbers<[1], [0], [0], [1], [0, 0, 1, 1], [], []>} : vector<8x128xf32>, vector<128x256xf32>, vector<8x256xf32> -> vector<8x256xf32>
    %c0_41 = arith.constant 0 : index
    %c0_42 = arith.constant 0 : index
    %c0_43 = arith.constant 0 : index
    %41 = vector.load %arg6[%c0_41, %c0_42, %c0_43] : memref<4x8x256xf32, #tpu.memory_space<vmem>>, vector<1x8x256xf32>
    %42 = vector.shape_cast %41 : vector<1x8x256xf32> to vector<8x256xf32>
    %43 = arith.addf %40, %42 : vector<8x256xf32>
    %44 = vector.extract_strided_slice %43 {offsets = [0, 0], sizes = [8, 128], strides = [1, 1]} : vector<8x256xf32> to vector<8x128xf32>
    %45 = arith.subf %0, %44 : vector<8x128xf32>
    %46 = vector.extract_strided_slice %43 {offsets = [0, 128], sizes = [8, 128], strides = [1, 1]} : vector<8x256xf32> to vector<8x128xf32>
    %47 = arith.addf %1, %46 : vector<8x128xf32>
    %c1_44 = arith.constant 1 : index
    %c0_45 = arith.constant 0 : index
    %c0_46 = arith.constant 0 : index
    %48 = vector.load %arg2[%c1_44, %c0_45, %c0_46] : memref<4x128x128xbf16, #tpu.memory_space<vmem>>, vector<1x128x128xbf16>
    %49 = vector.shape_cast %48 : vector<1x128x128xbf16> to vector<128x128xbf16>
    %50 = arith.extf %49 : vector<128x128xbf16> to vector<128x128xf32>
    %cst_47 = arith.constant dense<0.000000e+00> : vector<8x128xf32>
    %51 = tpu.matmul %45, %50, %cst_47 {dimension_numbers = #tpu.dot_dimension_numbers<[1], [0], [0], [1], [0, 0, 1, 1], [], []>} : vector<8x128xf32>, vector<128x128xf32>, vector<8x128xf32> -> vector<8x128xf32>
    %c1_48 = arith.constant 1 : index
    %c0_49 = arith.constant 0 : index
    %c0_50 = arith.constant 0 : index
    %c0_51 = arith.constant 0 : index
    %52 = vector.load %arg4[%c1_48, %c0_49, %c0_50, %c0_51] : memref<4x4x8x128xf32, #tpu.memory_space<vmem>>, vector<1x1x8x128xf32>
    %53 = vector.shape_cast %52 : vector<1x1x8x128xf32> to vector<8x128xf32>
    %54 = arith.addf %51, %53 : vector<8x128xf32>
    %cst_52 = arith.constant 0.000000e+00 : f32
    %55 = vector.broadcast %cst_52 : f32 to vector<8x128xf32>
    %56 = arith.maximumf %54, %55 : vector<8x128xf32>
    %c1_53 = arith.constant 1 : index
    %c0_54 = arith.constant 0 : index
    %c0_55 = arith.constant 0 : index
    %c0_56 = arith.constant 0 : index
    %57 = vector.load %arg3[%c1_53, %c0_54, %c0_55, %c0_56] : memref<4x3x128x128xbf16, #tpu.memory_space<vmem>>, vector<1x1x128x128xbf16>
    %58 = vector.shape_cast %57 : vector<1x1x128x128xbf16> to vector<128x128xbf16>
    %59 = arith.extf %58 : vector<128x128xbf16> to vector<128x128xf32>
    %cst_57 = arith.constant dense<0.000000e+00> : vector<8x128xf32>
    %60 = tpu.matmul %56, %59, %cst_57 {dimension_numbers = #tpu.dot_dimension_numbers<[1], [0], [0], [1], [0, 0, 1, 1], [], []>} : vector<8x128xf32>, vector<128x128xf32>, vector<8x128xf32> -> vector<8x128xf32>
    %c1_58 = arith.constant 1 : index
    %c1_59 = arith.constant 1 : index
    %c0_60 = arith.constant 0 : index
    %c0_61 = arith.constant 0 : index
    %61 = vector.load %arg4[%c1_58, %c1_59, %c0_60, %c0_61] : memref<4x4x8x128xf32, #tpu.memory_space<vmem>>, vector<1x1x8x128xf32>
    %62 = vector.shape_cast %61 : vector<1x1x8x128xf32> to vector<8x128xf32>
    %63 = arith.addf %60, %62 : vector<8x128xf32>
    %cst_62 = arith.constant 0.000000e+00 : f32
    %64 = vector.broadcast %cst_62 : f32 to vector<8x128xf32>
    %65 = arith.maximumf %63, %64 : vector<8x128xf32>
    %c1_63 = arith.constant 1 : index
    %c1_64 = arith.constant 1 : index
    %c0_65 = arith.constant 0 : index
    %c0_66 = arith.constant 0 : index
    %66 = vector.load %arg3[%c1_63, %c1_64, %c0_65, %c0_66] : memref<4x3x128x128xbf16, #tpu.memory_space<vmem>>, vector<1x1x128x128xbf16>
    %67 = vector.shape_cast %66 : vector<1x1x128x128xbf16> to vector<128x128xbf16>
    %68 = arith.extf %67 : vector<128x128xbf16> to vector<128x128xf32>
    %cst_67 = arith.constant dense<0.000000e+00> : vector<8x128xf32>
    %69 = tpu.matmul %65, %68, %cst_67 {dimension_numbers = #tpu.dot_dimension_numbers<[1], [0], [0], [1], [0, 0, 1, 1], [], []>} : vector<8x128xf32>, vector<128x128xf32>, vector<8x128xf32> -> vector<8x128xf32>
    %c1_68 = arith.constant 1 : index
    %c2_69 = arith.constant 2 : index
    %c0_70 = arith.constant 0 : index
    %c0_71 = arith.constant 0 : index
    %70 = vector.load %arg4[%c1_68, %c2_69, %c0_70, %c0_71] : memref<4x4x8x128xf32, #tpu.memory_space<vmem>>, vector<1x1x8x128xf32>
    %71 = vector.shape_cast %70 : vector<1x1x8x128xf32> to vector<8x128xf32>
    %72 = arith.addf %69, %71 : vector<8x128xf32>
    %cst_72 = arith.constant 0.000000e+00 : f32
    %73 = vector.broadcast %cst_72 : f32 to vector<8x128xf32>
    %74 = arith.maximumf %72, %73 : vector<8x128xf32>
    %c1_73 = arith.constant 1 : index
    %c2_74 = arith.constant 2 : index
    %c0_75 = arith.constant 0 : index
    %c0_76 = arith.constant 0 : index
    %75 = vector.load %arg3[%c1_73, %c2_74, %c0_75, %c0_76] : memref<4x3x128x128xbf16, #tpu.memory_space<vmem>>, vector<1x1x128x128xbf16>
    %76 = vector.shape_cast %75 : vector<1x1x128x128xbf16> to vector<128x128xbf16>
    %77 = arith.extf %76 : vector<128x128xbf16> to vector<128x128xf32>
    %cst_77 = arith.constant dense<0.000000e+00> : vector<8x128xf32>
    %78 = tpu.matmul %74, %77, %cst_77 {dimension_numbers = #tpu.dot_dimension_numbers<[1], [0], [0], [1], [0, 0, 1, 1], [], []>} : vector<8x128xf32>, vector<128x128xf32>, vector<8x128xf32> -> vector<8x128xf32>
    %c1_78 = arith.constant 1 : index
    %c3_79 = arith.constant 3 : index
    %c0_80 = arith.constant 0 : index
    %c0_81 = arith.constant 0 : index
    %79 = vector.load %arg4[%c1_78, %c3_79, %c0_80, %c0_81] : memref<4x4x8x128xf32, #tpu.memory_space<vmem>>, vector<1x1x8x128xf32>
    %80 = vector.shape_cast %79 : vector<1x1x8x128xf32> to vector<8x128xf32>
    %81 = arith.addf %78, %80 : vector<8x128xf32>
    %cst_82 = arith.constant 0.000000e+00 : f32
    %82 = vector.broadcast %cst_82 : f32 to vector<8x128xf32>
    %83 = arith.maximumf %81, %82 : vector<8x128xf32>
    %c1_83 = arith.constant 1 : index
    %c0_84 = arith.constant 0 : index
    %c0_85 = arith.constant 0 : index
    %84 = vector.load %arg5[%c1_83, %c0_84, %c0_85] : memref<4x128x256xf32, #tpu.memory_space<vmem>>, vector<1x128x256xf32>
    %85 = vector.shape_cast %84 : vector<1x128x256xf32> to vector<128x256xf32>
    %cst_86 = arith.constant dense<0.000000e+00> : vector<8x256xf32>
    %86 = tpu.matmul %83, %85, %cst_86 {dimension_numbers = #tpu.dot_dimension_numbers<[1], [0], [0], [1], [0, 0, 1, 1], [], []>} : vector<8x128xf32>, vector<128x256xf32>, vector<8x256xf32> -> vector<8x256xf32>
    %c1_87 = arith.constant 1 : index
    %c0_88 = arith.constant 0 : index
    %c0_89 = arith.constant 0 : index
    %87 = vector.load %arg6[%c1_87, %c0_88, %c0_89] : memref<4x8x256xf32, #tpu.memory_space<vmem>>, vector<1x8x256xf32>
    %88 = vector.shape_cast %87 : vector<1x8x256xf32> to vector<8x256xf32>
    %89 = arith.addf %86, %88 : vector<8x256xf32>
    %90 = vector.extract_strided_slice %89 {offsets = [0, 0], sizes = [8, 128], strides = [1, 1]} : vector<8x256xf32> to vector<8x128xf32>
    %91 = arith.subf %45, %90 : vector<8x128xf32>
    %92 = vector.extract_strided_slice %89 {offsets = [0, 128], sizes = [8, 128], strides = [1, 1]} : vector<8x256xf32> to vector<8x128xf32>
    %93 = arith.addf %47, %92 : vector<8x128xf32>
    %c2_90 = arith.constant 2 : index
    %c0_91 = arith.constant 0 : index
    %c0_92 = arith.constant 0 : index
    %94 = vector.load %arg2[%c2_90, %c0_91, %c0_92] : memref<4x128x128xbf16, #tpu.memory_space<vmem>>, vector<1x128x128xbf16>
    %95 = vector.shape_cast %94 : vector<1x128x128xbf16> to vector<128x128xbf16>
    %96 = arith.extf %95 : vector<128x128xbf16> to vector<128x128xf32>
    %cst_93 = arith.constant dense<0.000000e+00> : vector<8x128xf32>
    %97 = tpu.matmul %91, %96, %cst_93 {dimension_numbers = #tpu.dot_dimension_numbers<[1], [0], [0], [1], [0, 0, 1, 1], [], []>} : vector<8x128xf32>, vector<128x128xf32>, vector<8x128xf32> -> vector<8x128xf32>
    %c2_94 = arith.constant 2 : index
    %c0_95 = arith.constant 0 : index
    %c0_96 = arith.constant 0 : index
    %c0_97 = arith.constant 0 : index
    %98 = vector.load %arg4[%c2_94, %c0_95, %c0_96, %c0_97] : memref<4x4x8x128xf32, #tpu.memory_space<vmem>>, vector<1x1x8x128xf32>
    %99 = vector.shape_cast %98 : vector<1x1x8x128xf32> to vector<8x128xf32>
    %100 = arith.addf %97, %99 : vector<8x128xf32>
    %cst_98 = arith.constant 0.000000e+00 : f32
    %101 = vector.broadcast %cst_98 : f32 to vector<8x128xf32>
    %102 = arith.maximumf %100, %101 : vector<8x128xf32>
    %c2_99 = arith.constant 2 : index
    %c0_100 = arith.constant 0 : index
    %c0_101 = arith.constant 0 : index
    %c0_102 = arith.constant 0 : index
    %103 = vector.load %arg3[%c2_99, %c0_100, %c0_101, %c0_102] : memref<4x3x128x128xbf16, #tpu.memory_space<vmem>>, vector<1x1x128x128xbf16>
    %104 = vector.shape_cast %103 : vector<1x1x128x128xbf16> to vector<128x128xbf16>
    %105 = arith.extf %104 : vector<128x128xbf16> to vector<128x128xf32>
    %cst_103 = arith.constant dense<0.000000e+00> : vector<8x128xf32>
    %106 = tpu.matmul %102, %105, %cst_103 {dimension_numbers = #tpu.dot_dimension_numbers<[1], [0], [0], [1], [0, 0, 1, 1], [], []>} : vector<8x128xf32>, vector<128x128xf32>, vector<8x128xf32> -> vector<8x128xf32>
    %c2_104 = arith.constant 2 : index
    %c1_105 = arith.constant 1 : index
    %c0_106 = arith.constant 0 : index
    %c0_107 = arith.constant 0 : index
    %107 = vector.load %arg4[%c2_104, %c1_105, %c0_106, %c0_107] : memref<4x4x8x128xf32, #tpu.memory_space<vmem>>, vector<1x1x8x128xf32>
    %108 = vector.shape_cast %107 : vector<1x1x8x128xf32> to vector<8x128xf32>
    %109 = arith.addf %106, %108 : vector<8x128xf32>
    %cst_108 = arith.constant 0.000000e+00 : f32
    %110 = vector.broadcast %cst_108 : f32 to vector<8x128xf32>
    %111 = arith.maximumf %109, %110 : vector<8x128xf32>
    %c2_109 = arith.constant 2 : index
    %c1_110 = arith.constant 1 : index
    %c0_111 = arith.constant 0 : index
    %c0_112 = arith.constant 0 : index
    %112 = vector.load %arg3[%c2_109, %c1_110, %c0_111, %c0_112] : memref<4x3x128x128xbf16, #tpu.memory_space<vmem>>, vector<1x1x128x128xbf16>
    %113 = vector.shape_cast %112 : vector<1x1x128x128xbf16> to vector<128x128xbf16>
    %114 = arith.extf %113 : vector<128x128xbf16> to vector<128x128xf32>
    %cst_113 = arith.constant dense<0.000000e+00> : vector<8x128xf32>
    %115 = tpu.matmul %111, %114, %cst_113 {dimension_numbers = #tpu.dot_dimension_numbers<[1], [0], [0], [1], [0, 0, 1, 1], [], []>} : vector<8x128xf32>, vector<128x128xf32>, vector<8x128xf32> -> vector<8x128xf32>
    %c2_114 = arith.constant 2 : index
    %c2_115 = arith.constant 2 : index
    %c0_116 = arith.constant 0 : index
    %c0_117 = arith.constant 0 : index
    %116 = vector.load %arg4[%c2_114, %c2_115, %c0_116, %c0_117] : memref<4x4x8x128xf32, #tpu.memory_space<vmem>>, vector<1x1x8x128xf32>
    %117 = vector.shape_cast %116 : vector<1x1x8x128xf32> to vector<8x128xf32>
    %118 = arith.addf %115, %117 : vector<8x128xf32>
    %cst_118 = arith.constant 0.000000e+00 : f32
    %119 = vector.broadcast %cst_118 : f32 to vector<8x128xf32>
    %120 = arith.maximumf %118, %119 : vector<8x128xf32>
    %c2_119 = arith.constant 2 : index
    %c2_120 = arith.constant 2 : index
    %c0_121 = arith.constant 0 : index
    %c0_122 = arith.constant 0 : index
    %121 = vector.load %arg3[%c2_119, %c2_120, %c0_121, %c0_122] : memref<4x3x128x128xbf16, #tpu.memory_space<vmem>>, vector<1x1x128x128xbf16>
    %122 = vector.shape_cast %121 : vector<1x1x128x128xbf16> to vector<128x128xbf16>
    %123 = arith.extf %122 : vector<128x128xbf16> to vector<128x128xf32>
    %cst_123 = arith.constant dense<0.000000e+00> : vector<8x128xf32>
    %124 = tpu.matmul %120, %123, %cst_123 {dimension_numbers = #tpu.dot_dimension_numbers<[1], [0], [0], [1], [0, 0, 1, 1], [], []>} : vector<8x128xf32>, vector<128x128xf32>, vector<8x128xf32> -> vector<8x128xf32>
    %c2_124 = arith.constant 2 : index
    %c3_125 = arith.constant 3 : index
    %c0_126 = arith.constant 0 : index
    %c0_127 = arith.constant 0 : index
    %125 = vector.load %arg4[%c2_124, %c3_125, %c0_126, %c0_127] : memref<4x4x8x128xf32, #tpu.memory_space<vmem>>, vector<1x1x8x128xf32>
    %126 = vector.shape_cast %125 : vector<1x1x8x128xf32> to vector<8x128xf32>
    %127 = arith.addf %124, %126 : vector<8x128xf32>
    %cst_128 = arith.constant 0.000000e+00 : f32
    %128 = vector.broadcast %cst_128 : f32 to vector<8x128xf32>
    %129 = arith.maximumf %127, %128 : vector<8x128xf32>
    %c2_129 = arith.constant 2 : index
    %c0_130 = arith.constant 0 : index
    %c0_131 = arith.constant 0 : index
    %130 = vector.load %arg5[%c2_129, %c0_130, %c0_131] : memref<4x128x256xf32, #tpu.memory_space<vmem>>, vector<1x128x256xf32>
    %131 = vector.shape_cast %130 : vector<1x128x256xf32> to vector<128x256xf32>
    %cst_132 = arith.constant dense<0.000000e+00> : vector<8x256xf32>
    %132 = tpu.matmul %129, %131, %cst_132 {dimension_numbers = #tpu.dot_dimension_numbers<[1], [0], [0], [1], [0, 0, 1, 1], [], []>} : vector<8x128xf32>, vector<128x256xf32>, vector<8x256xf32> -> vector<8x256xf32>
    %c2_133 = arith.constant 2 : index
    %c0_134 = arith.constant 0 : index
    %c0_135 = arith.constant 0 : index
    %133 = vector.load %arg6[%c2_133, %c0_134, %c0_135] : memref<4x8x256xf32, #tpu.memory_space<vmem>>, vector<1x8x256xf32>
    %134 = vector.shape_cast %133 : vector<1x8x256xf32> to vector<8x256xf32>
    %135 = arith.addf %132, %134 : vector<8x256xf32>
    %136 = vector.extract_strided_slice %135 {offsets = [0, 0], sizes = [8, 128], strides = [1, 1]} : vector<8x256xf32> to vector<8x128xf32>
    %137 = arith.subf %91, %136 : vector<8x128xf32>
    %138 = vector.extract_strided_slice %135 {offsets = [0, 128], sizes = [8, 128], strides = [1, 1]} : vector<8x256xf32> to vector<8x128xf32>
    %139 = arith.addf %93, %138 : vector<8x128xf32>
    %c3_136 = arith.constant 3 : index
    %c0_137 = arith.constant 0 : index
    %c0_138 = arith.constant 0 : index
    %140 = vector.load %arg2[%c3_136, %c0_137, %c0_138] : memref<4x128x128xbf16, #tpu.memory_space<vmem>>, vector<1x128x128xbf16>
    %141 = vector.shape_cast %140 : vector<1x128x128xbf16> to vector<128x128xbf16>
    %142 = arith.extf %141 : vector<128x128xbf16> to vector<128x128xf32>
    %cst_139 = arith.constant dense<0.000000e+00> : vector<8x128xf32>
    %143 = tpu.matmul %137, %142, %cst_139 {dimension_numbers = #tpu.dot_dimension_numbers<[1], [0], [0], [1], [0, 0, 1, 1], [], []>} : vector<8x128xf32>, vector<128x128xf32>, vector<8x128xf32> -> vector<8x128xf32>
    %c3_140 = arith.constant 3 : index
    %c0_141 = arith.constant 0 : index
    %c0_142 = arith.constant 0 : index
    %c0_143 = arith.constant 0 : index
    %144 = vector.load %arg4[%c3_140, %c0_141, %c0_142, %c0_143] : memref<4x4x8x128xf32, #tpu.memory_space<vmem>>, vector<1x1x8x128xf32>
    %145 = vector.shape_cast %144 : vector<1x1x8x128xf32> to vector<8x128xf32>
    %146 = arith.addf %143, %145 : vector<8x128xf32>
    %cst_144 = arith.constant 0.000000e+00 : f32
    %147 = vector.broadcast %cst_144 : f32 to vector<8x128xf32>
    %148 = arith.maximumf %146, %147 : vector<8x128xf32>
    %c3_145 = arith.constant 3 : index
    %c0_146 = arith.constant 0 : index
    %c0_147 = arith.constant 0 : index
    %c0_148 = arith.constant 0 : index
    %149 = vector.load %arg3[%c3_145, %c0_146, %c0_147, %c0_148] : memref<4x3x128x128xbf16, #tpu.memory_space<vmem>>, vector<1x1x128x128xbf16>
    %150 = vector.shape_cast %149 : vector<1x1x128x128xbf16> to vector<128x128xbf16>
    %151 = arith.extf %150 : vector<128x128xbf16> to vector<128x128xf32>
    %cst_149 = arith.constant dense<0.000000e+00> : vector<8x128xf32>
    %152 = tpu.matmul %148, %151, %cst_149 {dimension_numbers = #tpu.dot_dimension_numbers<[1], [0], [0], [1], [0, 0, 1, 1], [], []>} : vector<8x128xf32>, vector<128x128xf32>, vector<8x128xf32> -> vector<8x128xf32>
    %c3_150 = arith.constant 3 : index
    %c1_151 = arith.constant 1 : index
    %c0_152 = arith.constant 0 : index
    %c0_153 = arith.constant 0 : index
    %153 = vector.load %arg4[%c3_150, %c1_151, %c0_152, %c0_153] : memref<4x4x8x128xf32, #tpu.memory_space<vmem>>, vector<1x1x8x128xf32>
    %154 = vector.shape_cast %153 : vector<1x1x8x128xf32> to vector<8x128xf32>
    %155 = arith.addf %152, %154 : vector<8x128xf32>
    %cst_154 = arith.constant 0.000000e+00 : f32
    %156 = vector.broadcast %cst_154 : f32 to vector<8x128xf32>
    %157 = arith.maximumf %155, %156 : vector<8x128xf32>
    %c3_155 = arith.constant 3 : index
    %c1_156 = arith.constant 1 : index
    %c0_157 = arith.constant 0 : index
    %c0_158 = arith.constant 0 : index
    %158 = vector.load %arg3[%c3_155, %c1_156, %c0_157, %c0_158] : memref<4x3x128x128xbf16, #tpu.memory_space<vmem>>, vector<1x1x128x128xbf16>
    %159 = vector.shape_cast %158 : vector<1x1x128x128xbf16> to vector<128x128xbf16>
    %160 = arith.extf %159 : vector<128x128xbf16> to vector<128x128xf32>
    %cst_159 = arith.constant dense<0.000000e+00> : vector<8x128xf32>
    %161 = tpu.matmul %157, %160, %cst_159 {dimension_numbers = #tpu.dot_dimension_numbers<[1], [0], [0], [1], [0, 0, 1, 1], [], []>} : vector<8x128xf32>, vector<128x128xf32>, vector<8x128xf32> -> vector<8x128xf32>
    %c3_160 = arith.constant 3 : index
    %c2_161 = arith.constant 2 : index
    %c0_162 = arith.constant 0 : index
    %c0_163 = arith.constant 0 : index
    %162 = vector.load %arg4[%c3_160, %c2_161, %c0_162, %c0_163] : memref<4x4x8x128xf32, #tpu.memory_space<vmem>>, vector<1x1x8x128xf32>
    %163 = vector.shape_cast %162 : vector<1x1x8x128xf32> to vector<8x128xf32>
    %164 = arith.addf %161, %163 : vector<8x128xf32>
    %cst_164 = arith.constant 0.000000e+00 : f32
    %165 = vector.broadcast %cst_164 : f32 to vector<8x128xf32>
    %166 = arith.maximumf %164, %165 : vector<8x128xf32>
    %c3_165 = arith.constant 3 : index
    %c2_166 = arith.constant 2 : index
    %c0_167 = arith.constant 0 : index
    %c0_168 = arith.constant 0 : index
    %167 = vector.load %arg3[%c3_165, %c2_166, %c0_167, %c0_168] : memref<4x3x128x128xbf16, #tpu.memory_space<vmem>>, vector<1x1x128x128xbf16>
    %168 = vector.shape_cast %167 : vector<1x1x128x128xbf16> to vector<128x128xbf16>
    %169 = arith.extf %168 : vector<128x128xbf16> to vector<128x128xf32>
    %cst_169 = arith.constant dense<0.000000e+00> : vector<8x128xf32>
    %170 = tpu.matmul %166, %169, %cst_169 {dimension_numbers = #tpu.dot_dimension_numbers<[1], [0], [0], [1], [0, 0, 1, 1], [], []>} : vector<8x128xf32>, vector<128x128xf32>, vector<8x128xf32> -> vector<8x128xf32>
    %c3_170 = arith.constant 3 : index
    %c3_171 = arith.constant 3 : index
    %c0_172 = arith.constant 0 : index
    %c0_173 = arith.constant 0 : index
    %171 = vector.load %arg4[%c3_170, %c3_171, %c0_172, %c0_173] : memref<4x4x8x128xf32, #tpu.memory_space<vmem>>, vector<1x1x8x128xf32>
    %172 = vector.shape_cast %171 : vector<1x1x8x128xf32> to vector<8x128xf32>
    %173 = arith.addf %170, %172 : vector<8x128xf32>
    %cst_174 = arith.constant 0.000000e+00 : f32
    %174 = vector.broadcast %cst_174 : f32 to vector<8x128xf32>
    %175 = arith.maximumf %173, %174 : vector<8x128xf32>
    %c3_175 = arith.constant 3 : index
    %c0_176 = arith.constant 0 : index
    %c0_177 = arith.constant 0 : index
    %176 = vector.load %arg5[%c3_175, %c0_176, %c0_177] : memref<4x128x256xf32, #tpu.memory_space<vmem>>, vector<1x128x256xf32>
    %177 = vector.shape_cast %176 : vector<1x128x256xf32> to vector<128x256xf32>
    %cst_178 = arith.constant dense<0.000000e+00> : vector<8x256xf32>
    %178 = tpu.matmul %175, %177, %cst_178 {dimension_numbers = #tpu.dot_dimension_numbers<[1], [0], [0], [1], [0, 0, 1, 1], [], []>} : vector<8x128xf32>, vector<128x256xf32>, vector<8x256xf32> -> vector<8x256xf32>
    %c3_179 = arith.constant 3 : index
    %c0_180 = arith.constant 0 : index
    %c0_181 = arith.constant 0 : index
    %179 = vector.load %arg6[%c3_179, %c0_180, %c0_181] : memref<4x8x256xf32, #tpu.memory_space<vmem>>, vector<1x8x256xf32>
    %180 = vector.shape_cast %179 : vector<1x8x256xf32> to vector<8x256xf32>
    %181 = arith.addf %178, %180 : vector<8x256xf32>
    %182 = vector.extract_strided_slice %181 {offsets = [0, 128], sizes = [8, 128], strides = [1, 1]} : vector<8x256xf32> to vector<8x128xf32>
    %183 = arith.addf %139, %182 : vector<8x128xf32>
    %c0_182 = arith.constant 0 : index
    %c0_183 = arith.constant 0 : index
    %184 = vector.load %arg7[%c0_182, %c0_183] : memref<8x128xf32, #tpu.memory_space<vmem>>, vector<8x128xf32>
    tpu.vector_store %arg7[%c0_182, %c0_183], %183 {strides = array<i32>} : memref<8x128xf32, #tpu.memory_space<vmem>>, vector<8x128xf32>,
    return
  }
  func.func @transform_0(%arg0: i32) -> (i32, i32) {
    %c0_i32 = arith.constant 0 : i32
    %c0_i32_0 = arith.constant 0 : i32
    return %arg0, %c0_i32 : i32, i32
  }
  func.func @transform_1(%arg0: i32) -> (i32, i32, i32) {
    %c0_i32 = arith.constant 0 : i32
    %c0_i32_0 = arith.constant 0 : i32
    %c0_i32_1 = arith.constant 0 : i32
    %c0_i32_2 = arith.constant 0 : i32
    return %c0_i32, %c0_i32_0, %c0_i32_1 : i32, i32, i32
  }
  func.func @transform_2(%arg0: i32) -> (i32, i32, i32, i32) {
    %c0_i32 = arith.constant 0 : i32
    %c0_i32_0 = arith.constant 0 : i32
    %c0_i32_1 = arith.constant 0 : i32
    %c0_i32_2 = arith.constant 0 : i32
    %c0_i32_3 = arith.constant 0 : i32
    return %c0_i32, %c0_i32_0, %c0_i32_1, %c0_i32_2 : i32, i32, i32, i32
  }
  func.func @transform_3(%arg0: i32) -> (i32, i32, i32, i32) {
    %c0_i32 = arith.constant 0 : i32
    %c0_i32_0 = arith.constant 0 : i32
    %c0_i32_1 = arith.constant 0 : i32
    %c0_i32_2 = arith.constant 0 : i32
    %c0_i32_3 = arith.constant 0 : i32
    return %c0_i32, %c0_i32_0, %c0_i32_1, %c0_i32_2 : i32, i32, i32, i32
  }
  func.func @transform_4(%arg0: i32) -> (i32, i32, i32) {
    %c0_i32 = arith.constant 0 : i32
    %c0_i32_0 = arith.constant 0 : i32
    %c0_i32_1 = arith.constant 0 : i32
    %c0_i32_2 = arith.constant 0 : i32
    return %c0_i32, %c0_i32_0, %c0_i32_1 : i32, i32, i32
  }
  func.func @transform_5(%arg0: i32) -> (i32, i32, i32) {
    %c0_i32 = arith.constant 0 : i32
    %c0_i32_0 = arith.constant 0 : i32
    %c0_i32_1 = arith.constant 0 : i32
    %c0_i32_2 = arith.constant 0 : i32
    return %c0_i32, %c0_i32_0, %c0_i32_1 : i32, i32, i32
  }
  func.func @transform_6(%arg0: i32) -> (i32, i32) {
    %c0_i32 = arith.constant 0 : i32
    %c0_i32_0 = arith.constant 0 : i32
    return %arg0, %c0_i32 : i32, i32
  }
}

</mosaic_0001>

<llo_original>
// kernel: tpu_custom_call.1
$region0: #{tpu_custom_call.1}
  #allocation0 [shape = 'u32[]', space=smem, size = 0x4, offset = 0x4, fixed_abs, tag = 'smem constant byte address 0x4 - core index']
  #allocation1 [shape = 'u32[72,128]{1,0:T(1,128)}', space=vmem, size = 0x9000, scoped, tag = 'internal scratch']
  %s0 = inlined_call_operand.hbm [shape: f32[8,128], index: 0, kind: input, shape index: {}]
  %s1 = inlined_call_operand.hbm [shape: bf16[4,128,128], index: 1, kind: input, shape index: {}]
  %s2 = inlined_call_operand.hbm [shape: bf16[4,3,128,128], index: 2, kind: input, shape index: {}]
  %s3 = inlined_call_operand.hbm [shape: f32[4,4,8,128], index: 3, kind: input, shape index: {}]
  %s4 = inlined_call_operand.hbm [shape: f32[4,128,256], index: 4, kind: input, shape index: {}]
  %s5 = inlined_call_operand.hbm [shape: f32[4,8,256], index: 5, kind: input, shape index: {}]
  %s6 = inlined_call_operand.hbm [shape: f32[8,128], index: 6, kind: output, shape index: {}]
  %s7 = sld [smem:[#allocation0]]
  $region58: #{tpu_custom_call.1} parent=0
    _
  %s9 = ssub.s32 1, %s7
  %s10 = scalar_select 0, %s9, %s7
  $region1: #{tpu_custom_call.1} parent=0
    #allocation2 [shape = 'u8[4096]{0}', space=vmem, size = 0x1000, scoped, tag = 'input window, operand 0, single buffered']
    #allocation3 [shape = 's32[1]{0}', space=sflag, size = 0x4, scoped, tag = 'scoped memory for tpu_custom_call.1']
    #allocation4 [shape = 's32[1]{0}', space=sflag, size = 0x4, scoped, tag = 'scoped memory for tpu_custom_call.1']
    #allocation5 [shape = 'u8[131072]{0}', space=vmem, size = 0x20000, scoped, tag = 'input window, operand 1, single buffered']
    #allocation6 [shape = 's32[1]{0}', space=sflag, size = 0x4, scoped, tag = 'scoped memory for tpu_custom_call.1']
    #allocation7 [shape = 'u8[393216]{0}', space=vmem, size = 0x60000, scoped, tag = 'input window, operand 2, single buffered']
    #allocation8 [shape = 'u8[65536]{0}', space=vmem, size = 0x10000, scoped, tag = 'input window, operand 3, single buffered']
    #allocation9 [shape = 's32[1]{0}', space=sflag, size = 0x4, scoped, tag = 'scoped memory for tpu_custom_call.1']
    #allocation10 [shape = 'u8[524288]{0}', space=vmem, size = 0x80000, scoped, tag = 'input window, operand 4, single buffered']
    #allocation11 [shape = 'u8[32768]{0}', space=vmem, size = 0x8000, scoped, tag = 'input window, operand 5, single buffered']
    #allocation12 [shape = 's32[1]{0}', space=sflag, size = 0x4, scoped, tag = 'scoped memory for tpu_custom_call.1']
    #allocation13 [shape = 'u8[4096]{0}', space=vmem, size = 0x1000, scoped, tag = 'output window, operand 0, single buffered']
    %11 = vsyncpa [#allocation3], 0
    %12 = vsyncpa [#allocation6], 0
    %13 = vsyncpa [#allocation9], 0
    %14 = vsyncpa [#allocation12], 0
    %15 = vsyncpa [#allocation4], 0
    // Predicated region
    $region2: #{tpu_custom_call.1} parent=1 // pred_check
      _
    $region3: #{tpu_custom_call.1} parent=1 // pred_check_branch
      %17 = sbr.rel (0) target = $region5
    $region4: #{tpu_custom_call.1} parent=1 // pred_region
      %19 = vsyncadd [#allocation3], 0
      %s21 = sshll.u32 %s0, 4
      %s22 = int_to_ptr.hbm [resolvable:$true] %s21
      %s23 = sshll.u32 [#allocation2], 4
      %s24 = int_to_ptr.vmem [resolvable:$true] %s23
      %26 = dma.hbm_to_vmem [thread:$0]  %s22, 128, %s24, [#allocation3]
    $region5: #{tpu_custom_call.1} parent=1 // pred_fallthru
      _
    // Predicated region
    $region6: #{tpu_custom_call.1} parent=1 // pred_check
      _
    $region7: #{tpu_custom_call.1} parent=1 // pred_check_branch
      %28 = sbr.rel (0) target = $region9
    $region8: #{tpu_custom_call.1} parent=1 // pred_region
      %30 = vsyncadd [#allocation6], 0
      %s31 = sshll.u32 %s1, 4
      %s32 = int_to_ptr.hbm [resolvable:$true] %s31
      %s33 = sshll.u32 [#allocation5], 4
      %s34 = int_to_ptr.vmem [resolvable:$true] %s33
      %39 = dma.hbm_to_vmem [thread:$0]  %s32, 4096, %s34, [#allocation6], 64, 64, 4
    $region9: #{tpu_custom_call.1} parent=1 // pred_fallthru
      _
    // Predicated region
    $region10: #{tpu_custom_call.1} parent=1 // pred_check
      _
    $region11: #{tpu_custom_call.1} parent=1 // pred_check_branch
      %41 = sbr.rel (0) target = $region13
    $region12: #{tpu_custom_call.1} parent=1 // pred_region
      %43 = vsyncadd [#allocation6], 0
      %s44 = sshll.u32 %s2, 4
      %s45 = int_to_ptr.hbm [resolvable:$true] %s44
      %s46 = sshll.u32 [#allocation7], 4
      %s47 = int_to_ptr.vmem [resolvable:$true] %s46
      %52 = dma.hbm_to_vmem [thread:$0]  %s45, 12288, %s47, [#allocation6], 64, 64, 4
    $region13: #{tpu_custom_call.1} parent=1 // pred_fallthru
      _
    // Predicated region
    $region14: #{tpu_custom_call.1} parent=1 // pred_check
      _
    $region15: #{tpu_custom_call.1} parent=1 // pred_check_branch
      %54 = sbr.rel (0) target = $region17
    $region16: #{tpu_custom_call.1} parent=1 // pred_region
      %56 = vsyncadd [#allocation9], 0
      %s57 = sshll.u32 %s3, 4
      %s58 = int_to_ptr.hbm [resolvable:$true] %s57
      %s59 = sshll.u32 [#allocation8], 4
      %s60 = int_to_ptr.vmem [resolvable:$true] %s59
      %65 = dma.hbm_to_vmem [thread:$0]  %s58, 2048, %s60, [#allocation9], 128, 128, 8
    $region17: #{tpu_custom_call.1} parent=1 // pred_fallthru
      _
    // Predicated region
    $region18: #{tpu_custom_call.1} parent=1 // pred_check
      _
    $region19: #{tpu_custom_call.1} parent=1 // pred_check_branch
      %67 = sbr.rel (0) target = $region21
    $region20: #{tpu_custom_call.1} parent=1 // pred_region
      %69 = vsyncadd [#allocation9], 0
      %s70 = sshll.u32 %s4, 4
      %s71 = int_to_ptr.hbm [resolvable:$true] %s70
      %s72 = sshll.u32 [#allocation10], 4
      %s73 = int_to_ptr.vmem [resolvable:$true] %s72
      %78 = dma.hbm_to_vmem [thread:$0]  %s71, 16384, %s73, [#allocation9], 256, 256, 16
    $region21: #{tpu_custom_call.1} parent=1 // pred_fallthru
      _
    // Predicated region
    $region22: #{tpu_custom_call.1} parent=1 // pred_check
      _
    $region23: #{tpu_custom_call.1} parent=1 // pred_check_branch
      %80 = sbr.rel (0) target = $region25
    $region24: #{tpu_custom_call.1} parent=1 // pred_region
      %82 = vsyncadd [#allocation12], 0
      %s83 = sshll.u32 %s5, 4
      %s84 = int_to_ptr.hbm [resolvable:$true] %s83
      %s85 = sshll.u32 [#allocation11], 4
      %s86 = int_to_ptr.vmem [resolvable:$true] %s85
      %91 = dma.hbm_to_vmem [thread:$0]  %s84, 1024, %s86, [#allocation12], 256, 256, 16
    $region25: #{tpu_custom_call.1} parent=1 // pred_fallthru
      _
    // Predicated region
    $region26: #{tpu_custom_call.1} parent=1 // pred_check
      _
    $region27: #{tpu_custom_call.1} parent=1 // pred_check_branch
      %93 = sbr.rel (0) target = $region29
    $region28: #{tpu_custom_call.1} parent=1 // pred_region
      %95 = dma.done [#allocation3], 128
    $region29: #{tpu_custom_call.1} parent=1 // pred_fallthru
      _
    // Predicated region
    $region30: #{tpu_custom_call.1} parent=1 // pred_check
      _
    $region31: #{tpu_custom_call.1} parent=1 // pred_check_branch
      %97 = sbr.rel (0) target = $region33
    $region32: #{tpu_custom_call.1} parent=1 // pred_region
      %99 = dma.done [#allocation6], 4096
    $region33: #{tpu_custom_call.1} parent=1 // pred_fallthru
      _
    // Predicated region
    $region34: #{tpu_custom_call.1} parent=1 // pred_check
      _
    $region35: #{tpu_custom_call.1} parent=1 // pred_check_branch
      %101 = sbr.rel (0) target = $region37
    $region36: #{tpu_custom_call.1} parent=1 // pred_region
      %103 = dma.done [#allocation6], 12288
    $region37: #{tpu_custom_call.1} parent=1 // pred_fallthru
      _
    // Predicated region
    $region38: #{tpu_custom_call.1} parent=1 // pred_check
      _
    $region39: #{tpu_custom_call.1} parent=1 // pred_check_branch
      %105 = sbr.rel (0) target = $region41
    $region40: #{tpu_custom_call.1} parent=1 // pred_region
      %107 = dma.done [#allocation9], 2048
    $region41: #{tpu_custom_call.1} parent=1 // pred_fallthru
      _
    // Predicated region
    $region42: #{tpu_custom_call.1} parent=1 // pred_check
      _
    $region43: #{tpu_custom_call.1} parent=1 // pred_check_branch
      %109 = sbr.rel (0) target = $region45
    $region44: #{tpu_custom_call.1} parent=1 // pred_region
      %111 = dma.done [#allocation9], 16384
    $region45: #{tpu_custom_call.1} parent=1 // pred_fallthru
      _
    // Predicated region
    $region46: #{tpu_custom_call.1} parent=1 // pred_check
      _
    $region47: #{tpu_custom_call.1} parent=1 // pred_check_branch
      %113 = sbr.rel (0) target = $region49
    $region48: #{tpu_custom_call.1} parent=1 // pred_region
      %115 = dma.done [#allocation12], 1024
    $region49: #{tpu_custom_call.1} parent=1 // pred_fallthru
      _
    %v116 = vld [vmem:[#allocation2] sm:$0xff]
    %v117 = vld [vmem:[#allocation5] sm:$0xf]
    %v118 = vld [vmem:[#allocation5 + $0x4] sm:$0xf]
    %v119 = vld [vmem:[#allocation5 + $0x8] sm:$0xf]
    %v120 = vld [vmem:[#allocation5 + $0xc] sm:$0xf]
    %v121 = vld [vmem:[#allocation5 + $0x10] sm:$0xf]
    %v122 = vld [vmem:[#allocation5 + $0x14] sm:$0xf]
    %v123 = vld [vmem:[#allocation5 + $0x18] sm:$0xf]
    %v124 = vld [vmem:[#allocation5 + $0x1c] sm:$0xf]
    %v125 = vld [vmem:[#allocation5 + $0x20] sm:$0xf]
    %v126 = vld [vmem:[#allocation5 + $0x24] sm:$0xf]
    %v127 = vld [vmem:[#allocation5 + $0x28] sm:$0xf]
    %v128 = vld [vmem:[#allocation5 + $0x2c] sm:$0xf]
    %v129 = vld [vmem:[#allocation5 + $0x30] sm:$0xf]
    %v130 = vld [vmem:[#allocation5 + $0x34] sm:$0xf]
    %v131 = vld [vmem:[#allocation5 + $0x38] sm:$0xf]
    %v132 = vld [vmem:[#allocation5 + $0x3c] sm:$0xf]
    %v133 = vunpack.c.l.bf16 %v117
    %v134 = vunpack.c.l.bf16 %v118
    %v135 = vunpack.c.l.bf16 %v119
    %v136 = vunpack.c.l.bf16 %v120
    %v137 = vunpack.c.l.bf16 %v121
    %v138 = vunpack.c.l.bf16 %v122
    %v139 = vunpack.c.l.bf16 %v123
    %v140 = vunpack.c.l.bf16 %v124
    %v141 = vunpack.c.l.bf16 %v125
    %v142 = vunpack.c.l.bf16 %v126
    %v143 = vunpack.c.l.bf16 %v127
    %v144 = vunpack.c.l.bf16 %v128
    %v145 = vunpack.c.l.bf16 %v129
    %v146 = vunpack.c.l.bf16 %v130
    %v147 = vunpack.c.l.bf16 %v131
    %v148 = vunpack.c.l.bf16 %v132
    %v149 = vld [vmem:[#allocation8] sm:$0xff]
    %150 = vmatpush.msra.mxu0 %v148
    %151 = vmatpush.msra.mxu0 %v147
    %152 = vmatpush.msra.mxu0 %v146
    %153 = vmatpush.msra.mxu0 %v145
    %154 = vmatpush.msra.mxu0 %v144
    %155 = vmatpush.msra.mxu0 %v143
    %156 = vmatpush.msra.mxu0 %v142
    %157 = vmatpush.msra.mxu0 %v141
    %158 = vmatpush.msra.mxu0 %v140
    %159 = vmatpush.msra.mxu0 %v139
    %160 = vmatpush.msra.mxu0 %v138
    %161 = vmatpush.msra.mxu0 %v137
    %162 = vmatpush.msra.mxu0 %v136
    %163 = vmatpush.msra.mxu0 %v135
    %164 = vmatpush.msra.mxu0 %v134
    %165 = vmatpush.msra.mxu0 %v133
    %166 = vmatmul.f32.gmra.mxu0 %v116
    %v167 = vpop.f32.mrf.mxu0
    %v168 = vadd.f32 %v149, %v167
    %169 = vdwg.mxu0
    %v170 = vmax.f32 %v168, 0.0
    %v171 = vld [vmem:[#allocation7] sm:$0xf]
    %v172 = vld [vmem:[#allocation7 + $0x4] sm:$0xf]
    %v173 = vld [vmem:[#allocation7 + $0x8] sm:$0xf]
    %v174 = vld [vmem:[#allocation7 + $0xc] sm:$0xf]
    %v175 = vld [vmem:[#allocation7 + $0x10] sm:$0xf]
    %v176 = vld [vmem:[#allocation7 + $0x14] sm:$0xf]
    %v177 = vld [vmem:[#allocation7 + $0x18] sm:$0xf]
    %v178 = vld [vmem:[#allocation7 + $0x1c] sm:$0xf]
    %v179 = vld [vmem:[#allocation7 + $0x20] sm:$0xf]
    %v180 = vld [vmem:[#allocation7 + $0x24] sm:$0xf]
    %v181 = vld [vmem:[#allocation7 + $0x28] sm:$0xf]
    %v182 = vld [vmem:[#allocation7 + $0x2c] sm:$0xf]
    %v183 = vld [vmem:[#allocation7 + $0x30] sm:$0xf]
    %v184 = vld [vmem:[#allocation7 + $0x34] sm:$0xf]
    %v185 = vld [vmem:[#allocation7 + $0x38] sm:$0xf]
    %v186 = vld [vmem:[#allocation7 + $0x3c] sm:$0xf]
    %v187 = vunpack.c.l.bf16 %v171
    %v188 = vunpack.c.l.bf16 %v172
    %v189 = vunpack.c.l.bf16 %v173
    %v190 = vunpack.c.l.bf16 %v174
    %v191 = vunpack.c.l.bf16 %v175
    %v192 = vunpack.c.l.bf16 %v176
    %v193 = vunpack.c.l.bf16 %v177
    %v194 = vunpack.c.l.bf16 %v178
    %v195 = vunpack.c.l.bf16 %v179
    %v196 = vunpack.c.l.bf16 %v180
    %v197 = vunpack.c.l.bf16 %v181
    %v198 = vunpack.c.l.bf16 %v182
    %v199 = vunpack.c.l.bf16 %v183
    %v200 = vunpack.c.l.bf16 %v184
    %v201 = vunpack.c.l.bf16 %v185
    %v202 = vunpack.c.l.bf16 %v186
    %s203 = scalar_lea.vmem [#allocation8], 8
    %v204 = vld [vmem:[%s203] sm:$0xff]
    %205 = vmatpush.msra.mxu0 %v202
    %206 = vmatpush.msra.mxu0 %v201
    %207 = vmatpush.msra.mxu0 %v200
    %208 = vmatpush.msra.mxu0 %v199
    %209 = vmatpush.msra.mxu0 %v198
    %210 = vmatpush.msra.mxu0 %v197
    %211 = vmatpush.msra.mxu0 %v196
    %212 = vmatpush.msra.mxu0 %v195
    %213 = vmatpush.msra.mxu0 %v194
    %214 = vmatpush.msra.mxu0 %v193
    %215 = vmatpush.msra.mxu0 %v192
    %216 = vmatpush.msra.mxu0 %v191
    %217 = vmatpush.msra.mxu0 %v190
    %218 = vmatpush.msra.mxu0 %v189
    %219 = vmatpush.msra.mxu0 %v188
    %220 = vmatpush.msra.mxu0 %v187
    %221 = vmatmul.f32.gmra.mxu0 %v170
    %v222 = vpop.f32.mrf.mxu0
    %v223 = vadd.f32 %v204, %v222
    %224 = vdwg.mxu0
    %v225 = vmax.f32 %v223, 0.0
    %s226 = scalar_lea.vmem [#allocation7], 64
    %v227 = vld [vmem:[%s226] sm:$0xf]
    %v228 = vld [vmem:[%s226 + $0x4] sm:$0xf]
    %v229 = vld [vmem:[%s226 + $0x8] sm:$0xf]
    %v230 = vld [vmem:[%s226 + $0xc] sm:$0xf]
    %v231 = vld [vmem:[%s226 + $0x10] sm:$0xf]
    %v232 = vld [vmem:[%s226 + $0x14] sm:$0xf]
    %v233 = vld [vmem:[%s226 + $0x18] sm:$0xf]
    %v234 = vld [vmem:[%s226 + $0x1c] sm:$0xf]
    %v235 = vld [vmem:[%s226 + $0x20] sm:$0xf]
    %v236 = vld [vmem:[%s226 + $0x24] sm:$0xf]
    %v237 = vld [vmem:[%s226 + $0x28] sm:$0xf]
    %v238 = vld [vmem:[%s226 + $0x2c] sm:$0xf]
    %v239 = vld [vmem:[%s226 + $0x30] sm:$0xf]
    %v240 = vld [vmem:[%s226 + $0x34] sm:$0xf]
    %v241 = vld [vmem:[%s226 + $0x38] sm:$0xf]
    %v242 = vld [vmem:[%s226 + $0x3c] sm:$0xf]
    %v243 = vunpack.c.l.bf16 %v227
    %v244 = vunpack.c.l.bf16 %v228
    %v245 = vunpack.c.l.bf16 %v229
    %v246 = vunpack.c.l.bf16 %v230
    %v247 = vunpack.c.l.bf16 %v231
    %v248 = vunpack.c.l.bf16 %v232
    %v249 = vunpack.c.l.bf16 %v233
    %v250 = vunpack.c.l.bf16 %v234
    %v251 = vunpack.c.l.bf16 %v235
    %v252 = vunpack.c.l.bf16 %v236
    %v253 = vunpack.c.l.bf16 %v237
    %v254 = vunpack.c.l.bf16 %v238
    %v255 = vunpack.c.l.bf16 %v239
    %v256 = vunpack.c.l.bf16 %v240
    %v257 = vunpack.c.l.bf16 %v241
    %v258 = vunpack.c.l.bf16 %v242
    %s259 = scalar_lea.vmem [#allocation8], 16
    %v260 = vld [vmem:[%s259] sm:$0xff]
    %261 = vmatpush.msra.mxu0 %v258
    %262 = vmatpush.msra.mxu0 %v257
    %263 = vmatpush.msra.mxu0 %v256
    %264 = vmatpush.msra.mxu0 %v255
    %265 = vmatpush.msra.mxu0 %v254
    %266 = vmatpush.msra.mxu0 %v253
    %267 = vmatpush.msra.mxu0 %v252
    %268 = vmatpush.msra.mxu0 %v251
    %269 = vmatpush.msra.mxu0 %v250
    %270 = vmatpush.msra.mxu0 %v249
    %271 = vmatpush.msra.mxu0 %v248
    %272 = vmatpush.msra.mxu0 %v247
    %273 = vmatpush.msra.mxu0 %v246
    %274 = vmatpush.msra.mxu0 %v245
    %275 = vmatpush.msra.mxu0 %v244
    %276 = vmatpush.msra.mxu0 %v243
    %277 = vmatmul.f32.gmra.mxu0 %v225
    %v278 = vpop.f32.mrf.mxu0
    %v279 = vadd.f32 %v260, %v278
    %280 = vdwg.mxu0
    %v281 = vmax.f32 %v279, 0.0
    %s282 = scalar_lea.vmem [#allocation7], 128
    %v283 = vld [vmem:[%s282] sm:$0xf]
    %v284 = vld [vmem:[%s282 + $0x4] sm:$0xf]
    %v285 = vld [vmem:[%s282 + $0x8] sm:$0xf]
    %v286 = vld [vmem:[%s282 + $0xc] sm:$0xf]
    %v287 = vld [vmem:[%s282 + $0x10] sm:$0xf]
    %v288 = vld [vmem:[%s282 + $0x14] sm:$0xf]
    %v289 = vld [vmem:[%s282 + $0x18] sm:$0xf]
    %v290 = vld [vmem:[%s282 + $0x1c] sm:$0xf]
    %v291 = vld [vmem:[%s282 + $0x20] sm:$0xf]
    %v292 = vld [vmem:[%s282 + $0x24] sm:$0xf]
    %v293 = vld [vmem:[%s282 + $0x28] sm:$0xf]
    %v294 = vld [vmem:[%s282 + $0x2c] sm:$0xf]
    %v295 = vld [vmem:[%s282 + $0x30] sm:$0xf]
    %v296 = vld [vmem:[%s282 + $0x34] sm:$0xf]
    %v297 = vld [vmem:[%s282 + $0x38] sm:$0xf]
    %v298 = vld [vmem:[%s282 + $0x3c] sm:$0xf]
    %v299 = vunpack.c.l.bf16 %v283
    %v300 = vunpack.c.l.bf16 %v284
    %v301 = vunpack.c.l.bf16 %v285
    %v302 = vunpack.c.l.bf16 %v286
    %v303 = vunpack.c.l.bf16 %v287
    %v304 = vunpack.c.l.bf16 %v288
    %v305 = vunpack.c.l.bf16 %v289
    %v306 = vunpack.c.l.bf16 %v290
    %v307 = vunpack.c.l.bf16 %v291
    %v308 = vunpack.c.l.bf16 %v292
    %v309 = vunpack.c.l.bf16 %v293
    %v310 = vunpack.c.l.bf16 %v294
    %v311 = vunpack.c.l.bf16 %v295
    %v312 = vunpack.c.l.bf16 %v296
    %v313 = vunpack.c.l.bf16 %v297
    %v314 = vunpack.c.l.bf16 %v298
    %s315 = scalar_lea.vmem [#allocation8], 24
    %v316 = vld [vmem:[%s315] sm:$0xff]
    %317 = vmatpush.msra.mxu0 %v314
    %318 = vmatpush.msra.mxu0 %v313
    %319 = vmatpush.msra.mxu0 %v312
    %320 = vmatpush.msra.mxu0 %v311
    %321 = vmatpush.msra.mxu0 %v310
    %322 = vmatpush.msra.mxu0 %v309
    %323 = vmatpush.msra.mxu0 %v308
    %324 = vmatpush.msra.mxu0 %v307
    %325 = vmatpush.msra.mxu0 %v306
    %326 = vmatpush.msra.mxu0 %v305
    %327 = vmatpush.msra.mxu0 %v304
    %328 = vmatpush.msra.mxu0 %v303
    %329 = vmatpush.msra.mxu0 %v302
    %330 = vmatpush.msra.mxu0 %v301
    %331 = vmatpush.msra.mxu0 %v300
    %332 = vmatpush.msra.mxu0 %v299
    %333 = vmatmul.f32.gmra.mxu0 %v281
    %v334 = vpop.f32.mrf.mxu0
    %v335 = vadd.f32 %v316, %v334
    %336 = vdwg.mxu0
    %v337 = vmax.f32 %v335, 0.0
    %v338 = vld [vmem:[#allocation10] sm:$0xff]
    %v339 = vld [vmem:[#allocation10 + $0x8] sm:$0xff]
    %v340 = vld [vmem:[#allocation10 + $0x10] sm:$0xff]
    %v341 = vld [vmem:[#allocation10 + $0x18] sm:$0xff]
    %v342 = vld [vmem:[#allocation10 + $0x20] sm:$0xff]
    %v343 = vld [vmem:[#allocation10 + $0x28] sm:$0xff]
    %v344 = vld [vmem:[#allocation10 + $0x30] sm:$0xff]
    %v345 = vld [vmem:[#allocation10 + $0x38] sm:$0xff]
    %v346 = vld [vmem:[#allocation10 + $0x40] sm:$0xff]
    %v347 = vld [vmem:[#allocation10 + $0x48] sm:$0xff]
    %v348 = vld [vmem:[#allocation10 + $0x50] sm:$0xff]
    %v349 = vld [vmem:[#allocation10 + $0x58] sm:$0xff]
    %v350 = vld [vmem:[#allocation10 + $0x60] sm:$0xff]
    %v351 = vld [vmem:[#allocation10 + $0x68] sm:$0xff]
    %v352 = vld [vmem:[#allocation10 + $0x70] sm:$0xff]
    %v353 = vld [vmem:[#allocation10 + $0x78] sm:$0xff]
    %v354 = vld [vmem:[#allocation10 + $0x80] sm:$0xff]
    %v355 = vld [vmem:[#allocation10 + $0x88] sm:$0xff]
    %v356 = vld [vmem:[#allocation10 + $0x90] sm:$0xff]
    %v357 = vld [vmem:[#allocation10 + $0x98] sm:$0xff]
    %v358 = vld [vmem:[#allocation10 + $0xa0] sm:$0xff]
    %v359 = vld [vmem:[#allocation10 + $0xa8] sm:$0xff]
    %v360 = vld [vmem:[#allocation10 + $0xb0] sm:$0xff]
    %v361 = vld [vmem:[#allocation10 + $0xb8] sm:$0xff]
    %v362 = vld [vmem:[#allocation10 + $0xc0] sm:$0xff]
    %v363 = vld [vmem:[#allocation10 + $0xc8] sm:$0xff]
    %v364 = vld [vmem:[#allocation10 + $0xd0] sm:$0xff]
    %v365 = vld [vmem:[#allocation10 + $0xd8] sm:$0xff]
    %v366 = vld [vmem:[#allocation10 + $0xe0] sm:$0xff]
    %v367 = vld [vmem:[#allocation10 + $0xe8] sm:$0xff]
    %v368 = vld [vmem:[#allocation10 + $0xf0] sm:$0xff]
    %v369 = vld [vmem:[#allocation10 + $0xf8] sm:$0xff]
    %v370 = vld [vmem:[#allocation11] sm:$0xff]
    %v371 = vld [vmem:[#allocation11 + $0x8] sm:$0xff]
    %372 = vmatpush.msra.mxu0 %v368
    %373 = vmatpush.msra.mxu0 %v366
    %374 = vmatpush.msra.mxu0 %v364
    %375 = vmatpush.msra.mxu0 %v362
    %376 = vmatpush.msra.mxu0 %v360
    %377 = vmatpush.msra.mxu0 %v358
    %378 = vmatpush.msra.mxu0 %v356
    %379 = vmatpush.msra.mxu0 %v354
    %380 = vmatpush.msra.mxu0 %v352
    %381 = vmatpush.msra.mxu0 %v350
    %382 = vmatpush.msra.mxu0 %v348
    %383 = vmatpush.msra.mxu0 %v346
    %384 = vmatpush.msra.mxu0 %v344
    %385 = vmatpush.msra.mxu0 %v342
    %386 = vmatpush.msra.mxu0 %v340
    %387 = vmatpush.msra.mxu0 %v338
    %388 = vmatmul.f32.gmra.mxu0 %v337
    %v389 = vpop.f32.mrf.mxu0
    %v390 = vadd.f32 %v370, %v389
    %391 = vdwg.mxu0
    %392 = vmatpush.msra.mxu0 %v369
    %393 = vmatpush.msra.mxu0 %v367
    %394 = vmatpush.msra.mxu0 %v365
    %395 = vmatpush.msra.mxu0 %v363
    %396 = vmatpush.msra.mxu0 %v361
    %397 = vmatpush.msra.mxu0 %v359
    %398 = vmatpush.msra.mxu0 %v357
    %399 = vmatpush.msra.mxu0 %v355
    %400 = vmatpush.msra.mxu0 %v353
    %401 = vmatpush.msra.mxu0 %v351
    %402 = vmatpush.msra.mxu0 %v349
    %403 = vmatpush.msra.mxu0 %v347
    %404 = vmatpush.msra.mxu0 %v345
    %405 = vmatpush.msra.mxu0 %v343
    %406 = vmatpush.msra.mxu0 %v341
    %407 = vmatpush.msra.mxu0 %v339
    %408 = vmatmul.f32.gmra.mxu0 %v337
    %v409 = vpop.f32.mrf.mxu0
    %v410 = vadd.f32 %v371, %v409
    %411 = vdwg.mxu0
    %v412 = vsub.f32 %v116, %v390
    %v413 = vadd.f32 %v410, 0.0
    %s414 = scalar_lea.vmem [#allocation5], 64
    %v415 = vld [vmem:[%s414] sm:$0xf]
    %v416 = vld [vmem:[%s414 + $0x4] sm:$0xf]
    %v417 = vld [vmem:[%s414 + $0x8] sm:$0xf]
    %v418 = vld [vmem:[%s414 + $0xc] sm:$0xf]
    %v419 = vld [vmem:[%s414 + $0x10] sm:$0xf]
    %v420 = vld [vmem:[%s414 + $0x14] sm:$0xf]
    %v421 = vld [vmem:[%s414 + $0x18] sm:$0xf]
    %v422 = vld [vmem:[%s414 + $0x1c] sm:$0xf]
    %v423 = vld [vmem:[%s414 + $0x20] sm:$0xf]
    %v424 = vld [vmem:[%s414 + $0x24] sm:$0xf]
    %v425 = vld [vmem:[%s414 + $0x28] sm:$0xf]
    %v426 = vld [vmem:[%s414 + $0x2c] sm:$0xf]
    %v427 = vld [vmem:[%s414 + $0x30] sm:$0xf]
    %v428 = vld [vmem:[%s414 + $0x34] sm:$0xf]
    %v429 = vld [vmem:[%s414 + $0x38] sm:$0xf]
    %v430 = vld [vmem:[%s414 + $0x3c] sm:$0xf]
    %v431 = vunpack.c.l.bf16 %v415
    %v432 = vunpack.c.l.bf16 %v416
    %v433 = vunpack.c.l.bf16 %v417
    %v434 = vunpack.c.l.bf16 %v418
    %v435 = vunpack.c.l.bf16 %v419
    %v436 = vunpack.c.l.bf16 %v420
    %v437 = vunpack.c.l.bf16 %v421
    %v438 = vunpack.c.l.bf16 %v422
    %v439 = vunpack.c.l.bf16 %v423
    %v440 = vunpack.c.l.bf16 %v424
    %v441 = vunpack.c.l.bf16 %v425
    %v442 = vunpack.c.l.bf16 %v426
    %v443 = vunpack.c.l.bf16 %v427
    %v444 = vunpack.c.l.bf16 %v428
    %v445 = vunpack.c.l.bf16 %v429
    %v446 = vunpack.c.l.bf16 %v430
    %s447 = scalar_lea.vmem [#allocation8], 32
    %v448 = vld [vmem:[%s447] sm:$0xff]
    %449 = vmatpush.msra.mxu0 %v446
    %450 = vmatpush.msra.mxu0 %v445
    %451 = vmatpush.msra.mxu0 %v444
    %452 = vmatpush.msra.mxu0 %v443
    %453 = vmatpush.msra.mxu0 %v442
    %454 = vmatpush.msra.mxu0 %v441
    %455 = vmatpush.msra.mxu0 %v440
    %456 = vmatpush.msra.mxu0 %v439
    %457 = vmatpush.msra.mxu0 %v438
    %458 = vmatpush.msra.mxu0 %v437
    %459 = vmatpush.msra.mxu0 %v436
    %460 = vmatpush.msra.mxu0 %v435
    %461 = vmatpush.msra.mxu0 %v434
    %462 = vmatpush.msra.mxu0 %v433
    %463 = vmatpush.msra.mxu0 %v432
    %464 = vmatpush.msra.mxu0 %v431
    %465 = vmatmul.f32.gmra.mxu0 %v412
    %v466 = vpop.f32.mrf.mxu0
    %v467 = vadd.f32 %v448, %v466
    %468 = vdwg.mxu0
    %v469 = vmax.f32 %v467, 0.0
    %s470 = scalar_lea.vmem [#allocation7], 192
    %v471 = vld [vmem:[%s470] sm:$0xf]
    %v472 = vld [vmem:[%s470 + $0x4] sm:$0xf]
    %v473 = vld [vmem:[%s470 + $0x8] sm:$0xf]
    %v474 = vld [vmem:[%s470 + $0xc] sm:$0xf]
    %v475 = vld [vmem:[%s470 + $0x10] sm:$0xf]
    %v476 = vld [vmem:[%s470 + $0x14] sm:$0xf]
    %v477 = vld [vmem:[%s470 + $0x18] sm:$0xf]
    %v478 = vld [vmem:[%s470 + $0x1c] sm:$0xf]
    %v479 = vld [vmem:[%s470 + $0x20] sm:$0xf]
    %v480 = vld [vmem:[%s470 + $0x24] sm:$0xf]
    %v481 = vld [vmem:[%s470 + $0x28] sm:$0xf]
    %v482 = vld [vmem:[%s470 + $0x2c] sm:$0xf]
    %v483 = vld [vmem:[%s470 + $0x30] sm:$0xf]
    %v484 = vld [vmem:[%s470 + $0x34] sm:$0xf]
    %v485 = vld [vmem:[%s470 + $0x38] sm:$0xf]
    %v486 = vld [vmem:[%s470 + $0x3c] sm:$0xf]
    %v487 = vunpack.c.l.bf16 %v471
    %v488 = vunpack.c.l.bf16 %v472
    %v489 = vunpack.c.l.bf16 %v473
    %v490 = vunpack.c.l.bf16 %v474
    %v491 = vunpack.c.l.bf16 %v475
    %v492 = vunpack.c.l.bf16 %v476
    %v493 = vunpack.c.l.bf16 %v477
    %v494 = vunpack.c.l.bf16 %v478
    %v495 = vunpack.c.l.bf16 %v479
    %v496 = vunpack.c.l.bf16 %v480
    %v497 = vunpack.c.l.bf16 %v481
    %v498 = vunpack.c.l.bf16 %v482
    %v499 = vunpack.c.l.bf16 %v483
    %v500 = vunpack.c.l.bf16 %v484
    %v501 = vunpack.c.l.bf16 %v485
    %v502 = vunpack.c.l.bf16 %v486
    %s503 = scalar_lea.vmem [#allocation8], 40
    %v504 = vld [vmem:[%s503] sm:$0xff]
    %505 = vmatpush.msra.mxu0 %v502
    %506 = vmatpush.msra.mxu0 %v501
    %507 = vmatpush.msra.mxu0 %v500
    %508 = vmatpush.msra.mxu0 %v499
    %509 = vmatpush.msra.mxu0 %v498
    %510 = vmatpush.msra.mxu0 %v497
    %511 = vmatpush.msra.mxu0 %v496
    %512 = vmatpush.msra.mxu0 %v495
    %513 = vmatpush.msra.mxu0 %v494
    %514 = vmatpush.msra.mxu0 %v493
    %515 = vmatpush.msra.mxu0 %v492
    %516 = vmatpush.msra.mxu0 %v491
    %517 = vmatpush.msra.mxu0 %v490
    %518 = vmatpush.msra.mxu0 %v489
    %519 = vmatpush.msra.mxu0 %v488
    %520 = vmatpush.msra.mxu0 %v487
    %521 = vmatmul.f32.gmra.mxu0 %v469
    %v522 = vpop.f32.mrf.mxu0
    %v523 = vadd.f32 %v504, %v522
    %524 = vdwg.mxu0
    %v525 = vmax.f32 %v523, 0.0
    %s526 = scalar_lea.vmem [#allocation7], 256
    %v527 = vld [vmem:[%s526] sm:$0xf]
    %v528 = vld [vmem:[%s526 + $0x4] sm:$0xf]
    %v529 = vld [vmem:[%s526 + $0x8] sm:$0xf]
    %v530 = vld [vmem:[%s526 + $0xc] sm:$0xf]
    %v531 = vld [vmem:[%s526 + $0x10] sm:$0xf]
    %v532 = vld [vmem:[%s526 + $0x14] sm:$0xf]
    %v533 = vld [vmem:[%s526 + $0x18] sm:$0xf]
    %v534 = vld [vmem:[%s526 + $0x1c] sm:$0xf]
    %v535 = vld [vmem:[%s526 + $0x20] sm:$0xf]
    %v536 = vld [vmem:[%s526 + $0x24] sm:$0xf]
    %v537 = vld [vmem:[%s526 + $0x28] sm:$0xf]
    %v538 = vld [vmem:[%s526 + $0x2c] sm:$0xf]
    %v539 = vld [vmem:[%s526 + $0x30] sm:$0xf]
    %v540 = vld [vmem:[%s526 + $0x34] sm:$0xf]
    %v541 = vld [vmem:[%s526 + $0x38] sm:$0xf]
    %v542 = vld [vmem:[%s526 + $0x3c] sm:$0xf]
    %v543 = vunpack.c.l.bf16 %v527
    %v544 = vunpack.c.l.bf16 %v528
    %v545 = vunpack.c.l.bf16 %v529
    %v546 = vunpack.c.l.bf16 %v530
    %v547 = vunpack.c.l.bf16 %v531
    %v548 = vunpack.c.l.bf16 %v532
    %v549 = vunpack.c.l.bf16 %v533
    %v550 = vunpack.c.l.bf16 %v534
    %v551 = vunpack.c.l.bf16 %v535
    %v552 = vunpack.c.l.bf16 %v536
    %v553 = vunpack.c.l.bf16 %v537
    %v554 = vunpack.c.l.bf16 %v538
    %v555 = vunpack.c.l.bf16 %v539
    %v556 = vunpack.c.l.bf16 %v540
    %v557 = vunpack.c.l.bf16 %v541
    %v558 = vunpack.c.l.bf16 %v542
    %s559 = scalar_lea.vmem [#allocation8], 48
    %v560 = vld [vmem:[%s559] sm:$0xff]
    %561 = vmatpush.msra.mxu0 %v558
    %562 = vmatpush.msra.mxu0 %v557
    %563 = vmatpush.msra.mxu0 %v556
    %564 = vmatpush.msra.mxu0 %v555
    %565 = vmatpush.msra.mxu0 %v554
    %566 = vmatpush.msra.mxu0 %v553
    %567 = vmatpush.msra.mxu0 %v552
    %568 = vmatpush.msra.mxu0 %v551
    %569 = vmatpush.msra.mxu0 %v550
    %570 = vmatpush.msra.mxu0 %v549
    %571 = vmatpush.msra.mxu0 %v548
    %572 = vmatpush.msra.mxu0 %v547
    %573 = vmatpush.msra.mxu0 %v546
    %574 = vmatpush.msra.mxu0 %v545
    %575 = vmatpush.msra.mxu0 %v544
    %576 = vmatpush.msra.mxu0 %v543
    %577 = vmatmul.f32.gmra.mxu0 %v525
    %v578 = vpop.f32.mrf.mxu0
    %v579 = vadd.f32 %v560, %v578
    %580 = vdwg.mxu0
    %v581 = vmax.f32 %v579, 0.0
    %s582 = scalar_lea.vmem [#allocation7], 320
    %v583 = vld [vmem:[%s582] sm:$0xf]
    %v584 = vld [vmem:[%s582 + $0x4] sm:$0xf]
    %v585 = vld [vmem:[%s582 + $0x8] sm:$0xf]
    %v586 = vld [vmem:[%s582 + $0xc] sm:$0xf]
    %v587 = vld [vmem:[%s582 + $0x10] sm:$0xf]
    %v588 = vld [vmem:[%s582 + $0x14] sm:$0xf]
    %v589 = vld [vmem:[%s582 + $0x18] sm:$0xf]
    %v590 = vld [vmem:[%s582 + $0x1c] sm:$0xf]
    %v591 = vld [vmem:[%s582 + $0x20] sm:$0xf]
    %v592 = vld [vmem:[%s582 + $0x24] sm:$0xf]
    %v593 = vld [vmem:[%s582 + $0x28] sm:$0xf]
    %v594 = vld [vmem:[%s582 + $0x2c] sm:$0xf]
    %v595 = vld [vmem:[%s582 + $0x30] sm:$0xf]
    %v596 = vld [vmem:[%s582 + $0x34] sm:$0xf]
    %v597 = vld [vmem:[%s582 + $0x38] sm:$0xf]
    %v598 = vld [vmem:[%s582 + $0x3c] sm:$0xf]
    %v599 = vunpack.c.l.bf16 %v583
    %v600 = vunpack.c.l.bf16 %v584
    %v601 = vunpack.c.l.bf16 %v585
    %v602 = vunpack.c.l.bf16 %v586
    %v603 = vunpack.c.l.bf16 %v587
    %v604 = vunpack.c.l.bf16 %v588
    %v605 = vunpack.c.l.bf16 %v589
    %v606 = vunpack.c.l.bf16 %v590
    %v607 = vunpack.c.l.bf16 %v591
    %v608 = vunpack.c.l.bf16 %v592
    %v609 = vunpack.c.l.bf16 %v593
    %v610 = vunpack.c.l.bf16 %v594
    %v611 = vunpack.c.l.bf16 %v595
    %v612 = vunpack.c.l.bf16 %v596
    %v613 = vunpack.c.l.bf16 %v597
    %v614 = vunpack.c.l.bf16 %v598
    %s615 = scalar_lea.vmem [#allocation8], 56
    %v616 = vld [vmem:[%s615] sm:$0xff]
    %617 = vmatpush.msra.mxu0 %v614
    %618 = vmatpush.msra.mxu0 %v613
    %619 = vmatpush.msra.mxu0 %v612
    %620 = vmatpush.msra.mxu0 %v611
    %621 = vmatpush.msra.mxu0 %v610
    %622 = vmatpush.msra.mxu0 %v609
    %623 = vmatpush.msra.mxu0 %v608
    %624 = vmatpush.msra.mxu0 %v607
    %625 = vmatpush.msra.mxu0 %v606
    %626 = vmatpush.msra.mxu0 %v605
    %627 = vmatpush.msra.mxu0 %v604
    %628 = vmatpush.msra.mxu0 %v603
    %629 = vmatpush.msra.mxu0 %v602
    %630 = vmatpush.msra.mxu0 %v601
    %631 = vmatpush.msra.mxu0 %v600
    %632 = vmatpush.msra.mxu0 %v599
    %633 = vmatmul.f32.gmra.mxu0 %v581
    %v634 = vpop.f32.mrf.mxu0
    %v635 = vadd.f32 %v616, %v634
    %636 = vdwg.mxu0
    %v637 = vmax.f32 %v635, 0.0
    %s638 = scalar_lea.vmem [#allocation10], 256
    %v639 = vld [vmem:[%s638] sm:$0xff]
    %v640 = vld [vmem:[%s638 + $0x8] sm:$0xff]
    %v641 = vld [vmem:[%s638 + $0x10] sm:$0xff]
    %v642 = vld [vmem:[%s638 + $0x18] sm:$0xff]
    %v643 = vld [vmem:[%s638 + $0x20] sm:$0xff]
    %v644 = vld [vmem:[%s638 + $0x28] sm:$0xff]
    %v645 = vld [vmem:[%s638 + $0x30] sm:$0xff]
    %v646 = vld [vmem:[%s638 + $0x38] sm:$0xff]
    %v647 = vld [vmem:[%s638 + $0x40] sm:$0xff]
    %v648 = vld [vmem:[%s638 + $0x48] sm:$0xff]
    %v649 = vld [vmem:[%s638 + $0x50] sm:$0xff]
    %v650 = vld [vmem:[%s638 + $0x58] sm:$0xff]
    %v651 = vld [vmem:[%s638 + $0x60] sm:$0xff]
    %v652 = vld [vmem:[%s638 + $0x68] sm:$0xff]
    %v653 = vld [vmem:[%s638 + $0x70] sm:$0xff]
    %v654 = vld [vmem:[%s638 + $0x78] sm:$0xff]
    %v655 = vld [vmem:[%s638 + $0x80] sm:$0xff]
    %v656 = vld [vmem:[%s638 + $0x88] sm:$0xff]
    %v657 = vld [vmem:[%s638 + $0x90] sm:$0xff]
    %v658 = vld [vmem:[%s638 + $0x98] sm:$0xff]
    %v659 = vld [vmem:[%s638 + $0xa0] sm:$0xff]
    %v660 = vld [vmem:[%s638 + $0xa8] sm:$0xff]
    %v661 = vld [vmem:[%s638 + $0xb0] sm:$0xff]
    %v662 = vld [vmem:[%s638 + $0xb8] sm:$0xff]
    %v663 = vld [vmem:[%s638 + $0xc0] sm:$0xff]
    %v664 = vld [vmem:[%s638 + $0xc8] sm:$0xff]
    %v665 = vld [vmem:[%s638 + $0xd0] sm:$0xff]
    %v666 = vld [vmem:[%s638 + $0xd8] sm:$0xff]
    %v667 = vld [vmem:[%s638 + $0xe0] sm:$0xff]
    %v668 = vld [vmem:[%s638 + $0xe8] sm:$0xff]
    %v669 = vld [vmem:[%s638 + $0xf0] sm:$0xff]
    %v670 = vld [vmem:[%s638 + $0xf8] sm:$0xff]
    %s671 = scalar_lea.vmem [#allocation11], 16
    %v672 = vld [vmem:[%s671] sm:$0xff]
    %v673 = vld [vmem:[%s671 + $0x8] sm:$0xff]
    %674 = vmatpush.msra.mxu0 %v669
    %675 = vmatpush.msra.mxu0 %v667
    %676 = vmatpush.msra.mxu0 %v665
    %677 = vmatpush.msra.mxu0 %v663
    %678 = vmatpush.msra.mxu0 %v661
    %679 = vmatpush.msra.mxu0 %v659
    %680 = vmatpush.msra.mxu0 %v657
    %681 = vmatpush.msra.mxu0 %v655
    %682 = vmatpush.msra.mxu0 %v653
    %683 = vmatpush.msra.mxu0 %v651
    %684 = vmatpush.msra.mxu0 %v649
    %685 = vmatpush.msra.mxu0 %v647
    %686 = vmatpush.msra.mxu0 %v645
    %687 = vmatpush.msra.mxu0 %v643
    %688 = vmatpush.msra.mxu0 %v641
    %689 = vmatpush.msra.mxu0 %v639
    %690 = vmatmul.f32.gmra.mxu0 %v637
    %v691 = vpop.f32.mrf.mxu0
    %v692 = vadd.f32 %v672, %v691
    %693 = vdwg.mxu0
    %694 = vmatpush.msra.mxu0 %v670
    %695 = vmatpush.msra.mxu0 %v668
    %696 = vmatpush.msra.mxu0 %v666
    %697 = vmatpush.msra.mxu0 %v664
    %698 = vmatpush.msra.mxu0 %v662
    %699 = vmatpush.msra.mxu0 %v660
    %700 = vmatpush.msra.mxu0 %v658
    %701 = vmatpush.msra.mxu0 %v656
    %702 = vmatpush.msra.mxu0 %v654
    %703 = vmatpush.msra.mxu0 %v652
    %704 = vmatpush.msra.mxu0 %v650
    %705 = vmatpush.msra.mxu0 %v648
    %706 = vmatpush.msra.mxu0 %v646
    %707 = vmatpush.msra.mxu0 %v644
    %708 = vmatpush.msra.mxu0 %v642
    %709 = vmatpush.msra.mxu0 %v640
    %710 = vmatmul.f32.gmra.mxu0 %v637
    %v711 = vpop.f32.mrf.mxu0
    %v712 = vadd.f32 %v673, %v711
    %713 = vdwg.mxu0
    %v714 = vsub.f32 %v412, %v692
    %v715 = vadd.f32 %v413, %v712
    %s716 = scalar_lea.vmem [#allocation5], 128
    %v717 = vld [vmem:[%s716] sm:$0xf]
    %v718 = vld [vmem:[%s716 + $0x4] sm:$0xf]
    %v719 = vld [vmem:[%s716 + $0x8] sm:$0xf]
    %v720 = vld [vmem:[%s716 + $0xc] sm:$0xf]
    %v721 = vld [vmem:[%s716 + $0x10] sm:$0xf]
    %v722 = vld [vmem:[%s716 + $0x14] sm:$0xf]
    %v723 = vld [vmem:[%s716 + $0x18] sm:$0xf]
    %v724 = vld [vmem:[%s716 + $0x1c] sm:$0xf]
    %v725 = vld [vmem:[%s716 + $0x20] sm:$0xf]
    %v726 = vld [vmem:[%s716 + $0x24] sm:$0xf]
    %v727 = vld [vmem:[%s716 + $0x28] sm:$0xf]
    %v728 = vld [vmem:[%s716 + $0x2c] sm:$0xf]
    %v729 = vld [vmem:[%s716 + $0x30] sm:$0xf]
    %v730 = vld [vmem:[%s716 + $0x34] sm:$0xf]
    %v731 = vld [vmem:[%s716 + $0x38] sm:$0xf]
    %v732 = vld [vmem:[%s716 + $0x3c] sm:$0xf]
    %v733 = vunpack.c.l.bf16 %v717
    %v734 = vunpack.c.l.bf16 %v718
    %v735 = vunpack.c.l.bf16 %v719
    %v736 = vunpack.c.l.bf16 %v720
    %v737 = vunpack.c.l.bf16 %v721
    %v738 = vunpack.c.l.bf16 %v722
    %v739 = vunpack.c.l.bf16 %v723
    %v740 = vunpack.c.l.bf16 %v724
    %v741 = vunpack.c.l.bf16 %v725
    %v742 = vunpack.c.l.bf16 %v726
    %v743 = vunpack.c.l.bf16 %v727
    %v744 = vunpack.c.l.bf16 %v728
    %v745 = vunpack.c.l.bf16 %v729
    %v746 = vunpack.c.l.bf16 %v730
    %v747 = vunpack.c.l.bf16 %v731
    %v748 = vunpack.c.l.bf16 %v732
    %s749 = scalar_lea.vmem [#allocation8], 64
    %v750 = vld [vmem:[%s749] sm:$0xff]
    %751 = vmatpush.msra.mxu0 %v748
    %752 = vmatpush.msra.mxu0 %v747
    %753 = vmatpush.msra.mxu0 %v746
    %754 = vmatpush.msra.mxu0 %v745
    %755 = vmatpush.msra.mxu0 %v744
    %756 = vmatpush.msra.mxu0 %v743
    %757 = vmatpush.msra.mxu0 %v742
    %758 = vmatpush.msra.mxu0 %v741
    %759 = vmatpush.msra.mxu0 %v740
    %760 = vmatpush.msra.mxu0 %v739
    %761 = vmatpush.msra.mxu0 %v738
    %762 = vmatpush.msra.mxu0 %v737
    %763 = vmatpush.msra.mxu0 %v736
    %764 = vmatpush.msra.mxu0 %v735
    %765 = vmatpush.msra.mxu0 %v734
    %766 = vmatpush.msra.mxu0 %v733
    %767 = vmatmul.f32.gmra.mxu0 %v714
    %v768 = vpop.f32.mrf.mxu0
    %v769 = vadd.f32 %v750, %v768
    %770 = vdwg.mxu0
    %v771 = vmax.f32 %v769, 0.0
    %s772 = scalar_lea.vmem [#allocation7], 384
    %v773 = vld [vmem:[%s772] sm:$0xf]
    %v774 = vld [vmem:[%s772 + $0x4] sm:$0xf]
    %v775 = vld [vmem:[%s772 + $0x8] sm:$0xf]
    %v776 = vld [vmem:[%s772 + $0xc] sm:$0xf]
    %v777 = vld [vmem:[%s772 + $0x10] sm:$0xf]
    %v778 = vld [vmem:[%s772 + $0x14] sm:$0xf]
    %v779 = vld [vmem:[%s772 + $0x18] sm:$0xf]
    %v780 = vld [vmem:[%s772 + $0x1c] sm:$0xf]
    %v781 = vld [vmem:[%s772 + $0x20] sm:$0xf]
    %v782 = vld [vmem:[%s772 + $0x24] sm:$0xf]
    %v783 = vld [vmem:[%s772 + $0x28] sm:$0xf]
    %v784 = vld [vmem:[%s772 + $0x2c] sm:$0xf]
    %v785 = vld [vmem:[%s772 + $0x30] sm:$0xf]
    %v786 = vld [vmem:[%s772 + $0x34] sm:$0xf]
    %v787 = vld [vmem:[%s772 + $0x38] sm:$0xf]
    %v788 = vld [vmem:[%s772 + $0x3c] sm:$0xf]
    %v789 = vunpack.c.l.bf16 %v773
    %v790 = vunpack.c.l.bf16 %v774
    %v791 = vunpack.c.l.bf16 %v775
    %v792 = vunpack.c.l.bf16 %v776
    %v793 = vunpack.c.l.bf16 %v777
    %v794 = vunpack.c.l.bf16 %v778
    %v795 = vunpack.c.l.bf16 %v779
    %v796 = vunpack.c.l.bf16 %v780
    %v797 = vunpack.c.l.bf16 %v781
    %v798 = vunpack.c.l.bf16 %v782
    %v799 = vunpack.c.l.bf16 %v783
    %v800 = vunpack.c.l.bf16 %v784
    %v801 = vunpack.c.l.bf16 %v785
    %v802 = vunpack.c.l.bf16 %v786
    %v803 = vunpack.c.l.bf16 %v787
    %v804 = vunpack.c.l.bf16 %v788
    %s805 = scalar_lea.vmem [#allocation8], 72
    %v806 = vld [vmem:[%s805] sm:$0xff]
    %807 = vmatpush.msra.mxu0 %v804
    %808 = vmatpush.msra.mxu0 %v803
    %809 = vmatpush.msra.mxu0 %v802
    %810 = vmatpush.msra.mxu0 %v801
    %811 = vmatpush.msra.mxu0 %v800
    %812 = vmatpush.msra.mxu0 %v799
    %813 = vmatpush.msra.mxu0 %v798
    %814 = vmatpush.msra.mxu0 %v797
    %815 = vmatpush.msra.mxu0 %v796
    %816 = vmatpush.msra.mxu0 %v795
    %817 = vmatpush.msra.mxu0 %v794
    %818 = vmatpush.msra.mxu0 %v793
    %819 = vmatpush.msra.mxu0 %v792
    %820 = vmatpush.msra.mxu0 %v791
    %821 = vmatpush.msra.mxu0 %v790
    %822 = vmatpush.msra.mxu0 %v789
    %823 = vmatmul.f32.gmra.mxu0 %v771
    %v824 = vpop.f32.mrf.mxu0
    %v825 = vadd.f32 %v806, %v824
    %826 = vdwg.mxu0
    %v827 = vmax.f32 %v825, 0.0
    %s828 = scalar_lea.vmem [#allocation7], 448
    %v829 = vld [vmem:[%s828] sm:$0xf]
    %v830 = vld [vmem:[%s828 + $0x4] sm:$0xf]
    %v831 = vld [vmem:[%s828 + $0x8] sm:$0xf]
    %v832 = vld [vmem:[%s828 + $0xc] sm:$0xf]
    %v833 = vld [vmem:[%s828 + $0x10] sm:$0xf]
    %v834 = vld [vmem:[%s828 + $0x14] sm:$0xf]
    %v835 = vld [vmem:[%s828 + $0x18] sm:$0xf]
    %v836 = vld [vmem:[%s828 + $0x1c] sm:$0xf]
    %v837 = vld [vmem:[%s828 + $0x20] sm:$0xf]
    %v838 = vld [vmem:[%s828 + $0x24] sm:$0xf]
    %v839 = vld [vmem:[%s828 + $0x28] sm:$0xf]
    %v840 = vld [vmem:[%s828 + $0x2c] sm:$0xf]
    %v841 = vld [vmem:[%s828 + $0x30] sm:$0xf]
    %v842 = vld [vmem:[%s828 + $0x34] sm:$0xf]
    %v843 = vld [vmem:[%s828 + $0x38] sm:$0xf]
    %v844 = vld [vmem:[%s828 + $0x3c] sm:$0xf]
    %v845 = vunpack.c.l.bf16 %v829
    %v846 = vunpack.c.l.bf16 %v830
    %v847 = vunpack.c.l.bf16 %v831
    %v848 = vunpack.c.l.bf16 %v832
    %v849 = vunpack.c.l.bf16 %v833
    %v850 = vunpack.c.l.bf16 %v834
    %v851 = vunpack.c.l.bf16 %v835
    %v852 = vunpack.c.l.bf16 %v836
    %v853 = vunpack.c.l.bf16 %v837
    %v854 = vunpack.c.l.bf16 %v838
    %v855 = vunpack.c.l.bf16 %v839
    %v856 = vunpack.c.l.bf16 %v840
    %v857 = vunpack.c.l.bf16 %v841
    %v858 = vunpack.c.l.bf16 %v842
    %v859 = vunpack.c.l.bf16 %v843
    %v860 = vunpack.c.l.bf16 %v844
    %s861 = scalar_lea.vmem [#allocation8], 80
    %v862 = vld [vmem:[%s861] sm:$0xff]
    %863 = vmatpush.msra.mxu0 %v860
    %864 = vmatpush.msra.mxu0 %v859
    %865 = vmatpush.msra.mxu0 %v858
    %866 = vmatpush.msra.mxu0 %v857
    %867 = vmatpush.msra.mxu0 %v856
    %868 = vmatpush.msra.mxu0 %v855
    %869 = vmatpush.msra.mxu0 %v854
    %870 = vmatpush.msra.mxu0 %v853
    %871 = vmatpush.msra.mxu0 %v852
    %872 = vmatpush.msra.mxu0 %v851
    %873 = vmatpush.msra.mxu0 %v850
    %874 = vmatpush.msra.mxu0 %v849
    %875 = vmatpush.msra.mxu0 %v848
    %876 = vmatpush.msra.mxu0 %v847
    %877 = vmatpush.msra.mxu0 %v846
    %878 = vmatpush.msra.mxu0 %v845
    %879 = vmatmul.f32.gmra.mxu0 %v827
    %v880 = vpop.f32.mrf.mxu0
    %v881 = vadd.f32 %v862, %v880
    %882 = vdwg.mxu0
    %v883 = vmax.f32 %v881, 0.0
    %s884 = scalar_lea.vmem [#allocation7], 512
    %v885 = vld [vmem:[%s884] sm:$0xf]
    %v886 = vld [vmem:[%s884 + $0x4] sm:$0xf]
    %v887 = vld [vmem:[%s884 + $0x8] sm:$0xf]
    %v888 = vld [vmem:[%s884 + $0xc] sm:$0xf]
    %v889 = vld [vmem:[%s884 + $0x10] sm:$0xf]
    %v890 = vld [vmem:[%s884 + $0x14] sm:$0xf]
    %v891 = vld [vmem:[%s884 + $0x18] sm:$0xf]
    %v892 = vld [vmem:[%s884 + $0x1c] sm:$0xf]
    %v893 = vld [vmem:[%s884 + $0x20] sm:$0xf]
    %v894 = vld [vmem:[%s884 + $0x24] sm:$0xf]
    %v895 = vld [vmem:[%s884 + $0x28] sm:$0xf]
    %v896 = vld [vmem:[%s884 + $0x2c] sm:$0xf]
    %v897 = vld [vmem:[%s884 + $0x30] sm:$0xf]
    %v898 = vld [vmem:[%s884 + $0x34] sm:$0xf]
    %v899 = vld [vmem:[%s884 + $0x38] sm:$0xf]
    %v900 = vld [vmem:[%s884 + $0x3c] sm:$0xf]
    %v901 = vunpack.c.l.bf16 %v885
    %v902 = vunpack.c.l.bf16 %v886
    %v903 = vunpack.c.l.bf16 %v887
    %v904 = vunpack.c.l.bf16 %v888
    %v905 = vunpack.c.l.bf16 %v889
    %v906 = vunpack.c.l.bf16 %v890
    %v907 = vunpack.c.l.bf16 %v891
    %v908 = vunpack.c.l.bf16 %v892
    %v909 = vunpack.c.l.bf16 %v893
    %v910 = vunpack.c.l.bf16 %v894
    %v911 = vunpack.c.l.bf16 %v895
    %v912 = vunpack.c.l.bf16 %v896
    %v913 = vunpack.c.l.bf16 %v897
    %v914 = vunpack.c.l.bf16 %v898
    %v915 = vunpack.c.l.bf16 %v899
    %v916 = vunpack.c.l.bf16 %v900
    %s917 = scalar_lea.vmem [#allocation8], 88
    %v918 = vld [vmem:[%s917] sm:$0xff]
    %919 = vmatpush.msra.mxu0 %v916
    %920 = vmatpush.msra.mxu0 %v915
    %921 = vmatpush.msra.mxu0 %v914
    %922 = vmatpush.msra.mxu0 %v913
    %923 = vmatpush.msra.mxu0 %v912
    %924 = vmatpush.msra.mxu0 %v911
    %925 = vmatpush.msra.mxu0 %v910
    %926 = vmatpush.msra.mxu0 %v909
    %927 = vmatpush.msra.mxu0 %v908
    %928 = vmatpush.msra.mxu0 %v907
    %929 = vmatpush.msra.mxu0 %v906
    %930 = vmatpush.msra.mxu0 %v905
    %931 = vmatpush.msra.mxu0 %v904
    %932 = vmatpush.msra.mxu0 %v903
    %933 = vmatpush.msra.mxu0 %v902
    %934 = vmatpush.msra.mxu0 %v901
    %935 = vmatmul.f32.gmra.mxu0 %v883
    %v936 = vpop.f32.mrf.mxu0
    %v937 = vadd.f32 %v918, %v936
    %938 = vdwg.mxu0
    %v939 = vmax.f32 %v937, 0.0
    %s940 = scalar_lea.vmem [#allocation10], 512
    %v941 = vld [vmem:[%s940] sm:$0xff]
    %v942 = vld [vmem:[%s940 + $0x8] sm:$0xff]
    %v943 = vld [vmem:[%s940 + $0x10] sm:$0xff]
    %v944 = vld [vmem:[%s940 + $0x18] sm:$0xff]
    %v945 = vld [vmem:[%s940 + $0x20] sm:$0xff]
    %v946 = vld [vmem:[%s940 + $0x28] sm:$0xff]
    %v947 = vld [vmem:[%s940 + $0x30] sm:$0xff]
    %v948 = vld [vmem:[%s940 + $0x38] sm:$0xff]
    %v949 = vld [vmem:[%s940 + $0x40] sm:$0xff]
    %v950 = vld [vmem:[%s940 + $0x48] sm:$0xff]
    %v951 = vld [vmem:[%s940 + $0x50] sm:$0xff]
    %v952 = vld [vmem:[%s940 + $0x58] sm:$0xff]
    %v953 = vld [vmem:[%s940 + $0x60] sm:$0xff]
    %v954 = vld [vmem:[%s940 + $0x68] sm:$0xff]
    %v955 = vld [vmem:[%s940 + $0x70] sm:$0xff]
    %v956 = vld [vmem:[%s940 + $0x78] sm:$0xff]
    %v957 = vld [vmem:[%s940 + $0x80] sm:$0xff]
    %v958 = vld [vmem:[%s940 + $0x88] sm:$0xff]
    %v959 = vld [vmem:[%s940 + $0x90] sm:$0xff]
    %v960 = vld [vmem:[%s940 + $0x98] sm:$0xff]
    %v961 = vld [vmem:[%s940 + $0xa0] sm:$0xff]
    %v962 = vld [vmem:[%s940 + $0xa8] sm:$0xff]
    %v963 = vld [vmem:[%s940 + $0xb0] sm:$0xff]
    %v964 = vld [vmem:[%s940 + $0xb8] sm:$0xff]
    %v965 = vld [vmem:[%s940 + $0xc0] sm:$0xff]
    %v966 = vld [vmem:[%s940 + $0xc8] sm:$0xff]
    %v967 = vld [vmem:[%s940 + $0xd0] sm:$0xff]
    %v968 = vld [vmem:[%s940 + $0xd8] sm:$0xff]
    %v969 = vld [vmem:[%s940 + $0xe0] sm:$0xff]
    %v970 = vld [vmem:[%s940 + $0xe8] sm:$0xff]
    %v971 = vld [vmem:[%s940 + $0xf0] sm:$0xff]
    %v972 = vld [vmem:[%s940 + $0xf8] sm:$0xff]
    %s973 = scalar_lea.vmem [#allocation11], 32
    %v974 = vld [vmem:[%s973] sm:$0xff]
    %v975 = vld [vmem:[%s973 + $0x8] sm:$0xff]
    %976 = vmatpush.msra.mxu0 %v971
    %977 = vmatpush.msra.mxu0 %v969
    %978 = vmatpush.msra.mxu0 %v967
    %979 = vmatpush.msra.mxu0 %v965
    %980 = vmatpush.msra.mxu0 %v963
    %981 = vmatpush.msra.mxu0 %v961
    %982 = vmatpush.msra.mxu0 %v959
    %983 = vmatpush.msra.mxu0 %v957
    %984 = vmatpush.msra.mxu0 %v955
    %985 = vmatpush.msra.mxu0 %v953
    %986 = vmatpush.msra.mxu0 %v951
    %987 = vmatpush.msra.mxu0 %v949
    %988 = vmatpush.msra.mxu0 %v947
    %989 = vmatpush.msra.mxu0 %v945
    %990 = vmatpush.msra.mxu0 %v943
    %991 = vmatpush.msra.mxu0 %v941
    %992 = vmatmul.f32.gmra.mxu0 %v939
    %v993 = vpop.f32.mrf.mxu0
    %v994 = vadd.f32 %v974, %v993
    %995 = vdwg.mxu0
    %996 = vmatpush.msra.mxu0 %v972
    %997 = vmatpush.msra.mxu0 %v970
    %998 = vmatpush.msra.mxu0 %v968
    %999 = vmatpush.msra.mxu0 %v966
    %1000 = vmatpush.msra.mxu0 %v964
    %1001 = vmatpush.msra.mxu0 %v962
    %1002 = vmatpush.msra.mxu0 %v960
    %1003 = vmatpush.msra.mxu0 %v958
    %1004 = vmatpush.msra.mxu0 %v956
    %1005 = vmatpush.msra.mxu0 %v954
    %1006 = vmatpush.msra.mxu0 %v952
    %1007 = vmatpush.msra.mxu0 %v950
    %1008 = vmatpush.msra.mxu0 %v948
    %1009 = vmatpush.msra.mxu0 %v946
    %1010 = vmatpush.msra.mxu0 %v944
    %1011 = vmatpush.msra.mxu0 %v942
    %1012 = vmatmul.f32.gmra.mxu0 %v939
    %v1013 = vpop.f32.mrf.mxu0
    %v1014 = vadd.f32 %v975, %v1013
    %1015 = vdwg.mxu0
    %v1016 = vsub.f32 %v714, %v994
    %v1017 = vadd.f32 %v715, %v1014
    %s1018 = scalar_lea.vmem [#allocation5], 192
    %v1019 = vld [vmem:[%s1018] sm:$0xf]
    %v1020 = vld [vmem:[%s1018 + $0x4] sm:$0xf]
    %v1021 = vld [vmem:[%s1018 + $0x8] sm:$0xf]
    %v1022 = vld [vmem:[%s1018 + $0xc] sm:$0xf]
    %v1023 = vld [vmem:[%s1018 + $0x10] sm:$0xf]
    %v1024 = vld [vmem:[%s1018 + $0x14] sm:$0xf]
    %v1025 = vld [vmem:[%s1018 + $0x18] sm:$0xf]
    %v1026 = vld [vmem:[%s1018 + $0x1c] sm:$0xf]
    %v1027 = vld [vmem:[%s1018 + $0x20] sm:$0xf]
    %v1028 = vld [vmem:[%s1018 + $0x24] sm:$0xf]
    %v1029 = vld [vmem:[%s1018 + $0x28] sm:$0xf]
    %v1030 = vld [vmem:[%s1018 + $0x2c] sm:$0xf]
    %v1031 = vld [vmem:[%s1018 + $0x30] sm:$0xf]
    %v1032 = vld [vmem:[%s1018 + $0x34] sm:$0xf]
    %v1033 = vld [vmem:[%s1018 + $0x38] sm:$0xf]
    %v1034 = vld [vmem:[%s1018 + $0x3c] sm:$0xf]
    %v1035 = vunpack.c.l.bf16 %v1019
    %v1036 = vunpack.c.l.bf16 %v1020
    %v1037 = vunpack.c.l.bf16 %v1021
    %v1038 = vunpack.c.l.bf16 %v1022
    %v1039 = vunpack.c.l.bf16 %v1023
    %v1040 = vunpack.c.l.bf16 %v1024
    %v1041 = vunpack.c.l.bf16 %v1025
    %v1042 = vunpack.c.l.bf16 %v1026
    %v1043 = vunpack.c.l.bf16 %v1027
    %v1044 = vunpack.c.l.bf16 %v1028
    %v1045 = vunpack.c.l.bf16 %v1029
    %v1046 = vunpack.c.l.bf16 %v1030
    %v1047 = vunpack.c.l.bf16 %v1031
    %v1048 = vunpack.c.l.bf16 %v1032
    %v1049 = vunpack.c.l.bf16 %v1033
    %v1050 = vunpack.c.l.bf16 %v1034
    %s1051 = scalar_lea.vmem [#allocation8], 96
    %v1052 = vld [vmem:[%s1051] sm:$0xff]
    %1053 = vmatpush.msra.mxu0 %v1050
    %1054 = vmatpush.msra.mxu0 %v1049
    %1055 = vmatpush.msra.mxu0 %v1048
    %1056 = vmatpush.msra.mxu0 %v1047
    %1057 = vmatpush.msra.mxu0 %v1046
    %1058 = vmatpush.msra.mxu0 %v1045
    %1059 = vmatpush.msra.mxu0 %v1044
    %1060 = vmatpush.msra.mxu0 %v1043
    %1061 = vmatpush.msra.mxu0 %v1042
    %1062 = vmatpush.msra.mxu0 %v1041
    %1063 = vmatpush.msra.mxu0 %v1040
    %1064 = vmatpush.msra.mxu0 %v1039
    %1065 = vmatpush.msra.mxu0 %v1038
    %1066 = vmatpush.msra.mxu0 %v1037
    %1067 = vmatpush.msra.mxu0 %v1036
    %1068 = vmatpush.msra.mxu0 %v1035
    %1069 = vmatmul.f32.gmra.mxu0 %v1016
    %v1070 = vpop.f32.mrf.mxu0
    %v1071 = vadd.f32 %v1052, %v1070
    %1072 = vdwg.mxu0
    %v1073 = vmax.f32 %v1071, 0.0
    %s1074 = scalar_lea.vmem [#allocation7], 576
    %v1075 = vld [vmem:[%s1074] sm:$0xf]
    %v1076 = vld [vmem:[%s1074 + $0x4] sm:$0xf]
    %v1077 = vld [vmem:[%s1074 + $0x8] sm:$0xf]
    %v1078 = vld [vmem:[%s1074 + $0xc] sm:$0xf]
    %v1079 = vld [vmem:[%s1074 + $0x10] sm:$0xf]
    %v1080 = vld [vmem:[%s1074 + $0x14] sm:$0xf]
    %v1081 = vld [vmem:[%s1074 + $0x18] sm:$0xf]
    %v1082 = vld [vmem:[%s1074 + $0x1c] sm:$0xf]
    %v1083 = vld [vmem:[%s1074 + $0x20] sm:$0xf]
    %v1084 = vld [vmem:[%s1074 + $0x24] sm:$0xf]
    %v1085 = vld [vmem:[%s1074 + $0x28] sm:$0xf]
    %v1086 = vld [vmem:[%s1074 + $0x2c] sm:$0xf]
    %v1087 = vld [vmem:[%s1074 + $0x30] sm:$0xf]
    %v1088 = vld [vmem:[%s1074 + $0x34] sm:$0xf]
    %v1089 = vld [vmem:[%s1074 + $0x38] sm:$0xf]
    %v1090 = vld [vmem:[%s1074 + $0x3c] sm:$0xf]
    %v1091 = vunpack.c.l.bf16 %v1075
    %v1092 = vunpack.c.l.bf16 %v1076
    %v1093 = vunpack.c.l.bf16 %v1077
    %v1094 = vunpack.c.l.bf16 %v1078
    %v1095 = vunpack.c.l.bf16 %v1079
    %v1096 = vunpack.c.l.bf16 %v1080
    %v1097 = vunpack.c.l.bf16 %v1081
    %v1098 = vunpack.c.l.bf16 %v1082
    %v1099 = vunpack.c.l.bf16 %v1083
    %v1100 = vunpack.c.l.bf16 %v1084
    %v1101 = vunpack.c.l.bf16 %v1085
    %v1102 = vunpack.c.l.bf16 %v1086
    %v1103 = vunpack.c.l.bf16 %v1087
    %v1104 = vunpack.c.l.bf16 %v1088
    %v1105 = vunpack.c.l.bf16 %v1089
    %v1106 = vunpack.c.l.bf16 %v1090
    %s1107 = scalar_lea.vmem [#allocation8], 104
    %v1108 = vld [vmem:[%s1107] sm:$0xff]
    %1109 = vmatpush.msra.mxu0 %v1106
    %1110 = vmatpush.msra.mxu0 %v1105
    %1111 = vmatpush.msra.mxu0 %v1104
    %1112 = vmatpush.msra.mxu0 %v1103
    %1113 = vmatpush.msra.mxu0 %v1102
    %1114 = vmatpush.msra.mxu0 %v1101
    %1115 = vmatpush.msra.mxu0 %v1100
    %1116 = vmatpush.msra.mxu0 %v1099
    %1117 = vmatpush.msra.mxu0 %v1098
    %1118 = vmatpush.msra.mxu0 %v1097
    %1119 = vmatpush.msra.mxu0 %v1096
    %1120 = vmatpush.msra.mxu0 %v1095
    %1121 = vmatpush.msra.mxu0 %v1094
    %1122 = vmatpush.msra.mxu0 %v1093
    %1123 = vmatpush.msra.mxu0 %v1092
    %1124 = vmatpush.msra.mxu0 %v1091
    %1125 = vmatmul.f32.gmra.mxu0 %v1073
    %v1126 = vpop.f32.mrf.mxu0
    %v1127 = vadd.f32 %v1108, %v1126
    %1128 = vdwg.mxu0
    %v1129 = vmax.f32 %v1127, 0.0
    %s1130 = scalar_lea.vmem [#allocation7], 640
    %v1131 = vld [vmem:[%s1130] sm:$0xf]
    %v1132 = vld [vmem:[%s1130 + $0x4] sm:$0xf]
    %v1133 = vld [vmem:[%s1130 + $0x8] sm:$0xf]
    %v1134 = vld [vmem:[%s1130 + $0xc] sm:$0xf]
    %v1135 = vld [vmem:[%s1130 + $0x10] sm:$0xf]
    %v1136 = vld [vmem:[%s1130 + $0x14] sm:$0xf]
    %v1137 = vld [vmem:[%s1130 + $0x18] sm:$0xf]
    %v1138 = vld [vmem:[%s1130 + $0x1c] sm:$0xf]
    %v1139 = vld [vmem:[%s1130 + $0x20] sm:$0xf]
    %v1140 = vld [vmem:[%s1130 + $0x24] sm:$0xf]
    %v1141 = vld [vmem:[%s1130 + $0x28] sm:$0xf]
    %v1142 = vld [vmem:[%s1130 + $0x2c] sm:$0xf]
    %v1143 = vld [vmem:[%s1130 + $0x30] sm:$0xf]
    %v1144 = vld [vmem:[%s1130 + $0x34] sm:$0xf]
    %v1145 = vld [vmem:[%s1130 + $0x38] sm:$0xf]
    %v1146 = vld [vmem:[%s1130 + $0x3c] sm:$0xf]
    %v1147 = vunpack.c.l.bf16 %v1131
    %v1148 = vunpack.c.l.bf16 %v1132
    %v1149 = vunpack.c.l.bf16 %v1133
    %v1150 = vunpack.c.l.bf16 %v1134
    %v1151 = vunpack.c.l.bf16 %v1135
    %v1152 = vunpack.c.l.bf16 %v1136
    %v1153 = vunpack.c.l.bf16 %v1137
    %v1154 = vunpack.c.l.bf16 %v1138
    %v1155 = vunpack.c.l.bf16 %v1139
    %v1156 = vunpack.c.l.bf16 %v1140
    %v1157 = vunpack.c.l.bf16 %v1141
    %v1158 = vunpack.c.l.bf16 %v1142
    %v1159 = vunpack.c.l.bf16 %v1143
    %v1160 = vunpack.c.l.bf16 %v1144
    %v1161 = vunpack.c.l.bf16 %v1145
    %v1162 = vunpack.c.l.bf16 %v1146
    %s1163 = scalar_lea.vmem [#allocation8], 112
    %v1164 = vld [vmem:[%s1163] sm:$0xff]
    %1165 = vmatpush.msra.mxu0 %v1162
    %1166 = vmatpush.msra.mxu0 %v1161
    %1167 = vmatpush.msra.mxu0 %v1160
    %1168 = vmatpush.msra.mxu0 %v1159
    %1169 = vmatpush.msra.mxu0 %v1158
    %1170 = vmatpush.msra.mxu0 %v1157
    %1171 = vmatpush.msra.mxu0 %v1156
    %1172 = vmatpush.msra.mxu0 %v1155
    %1173 = vmatpush.msra.mxu0 %v1154
    %1174 = vmatpush.msra.mxu0 %v1153
    %1175 = vmatpush.msra.mxu0 %v1152
    %1176 = vmatpush.msra.mxu0 %v1151
    %1177 = vmatpush.msra.mxu0 %v1150
    %1178 = vmatpush.msra.mxu0 %v1149
    %1179 = vmatpush.msra.mxu0 %v1148
    %1180 = vmatpush.msra.mxu0 %v1147
    %1181 = vmatmul.f32.gmra.mxu0 %v1129
    %v1182 = vpop.f32.mrf.mxu0
    %v1183 = vadd.f32 %v1164, %v1182
    %1184 = vdwg.mxu0
    %v1185 = vmax.f32 %v1183, 0.0
    %s1186 = scalar_lea.vmem [#allocation7], 704
    %v1187 = vld [vmem:[%s1186] sm:$0xf]
    %v1188 = vld [vmem:[%s1186 + $0x4] sm:$0xf]
    %v1189 = vld [vmem:[%s1186 + $0x8] sm:$0xf]
    %v1190 = vld [vmem:[%s1186 + $0xc] sm:$0xf]
    %v1191 = vld [vmem:[%s1186 + $0x10] sm:$0xf]
    %v1192 = vld [vmem:[%s1186 + $0x14] sm:$0xf]
    %v1193 = vld [vmem:[%s1186 + $0x18] sm:$0xf]
    %v1194 = vld [vmem:[%s1186 + $0x1c] sm:$0xf]
    %v1195 = vld [vmem:[%s1186 + $0x20] sm:$0xf]
    %v1196 = vld [vmem:[%s1186 + $0x24] sm:$0xf]
    %v1197 = vld [vmem:[%s1186 + $0x28] sm:$0xf]
    %v1198 = vld [vmem:[%s1186 + $0x2c] sm:$0xf]
    %v1199 = vld [vmem:[%s1186 + $0x30] sm:$0xf]
    %v1200 = vld [vmem:[%s1186 + $0x34] sm:$0xf]
    %v1201 = vld [vmem:[%s1186 + $0x38] sm:$0xf]
    %v1202 = vld [vmem:[%s1186 + $0x3c] sm:$0xf]
    %v1203 = vunpack.c.l.bf16 %v1187
    %v1204 = vunpack.c.l.bf16 %v1188
    %v1205 = vunpack.c.l.bf16 %v1189
    %v1206 = vunpack.c.l.bf16 %v1190
    %v1207 = vunpack.c.l.bf16 %v1191
    %v1208 = vunpack.c.l.bf16 %v1192
    %v1209 = vunpack.c.l.bf16 %v1193
    %v1210 = vunpack.c.l.bf16 %v1194
    %v1211 = vunpack.c.l.bf16 %v1195
    %v1212 = vunpack.c.l.bf16 %v1196
    %v1213 = vunpack.c.l.bf16 %v1197
    %v1214 = vunpack.c.l.bf16 %v1198
    %v1215 = vunpack.c.l.bf16 %v1199
    %v1216 = vunpack.c.l.bf16 %v1200
    %v1217 = vunpack.c.l.bf16 %v1201
    %v1218 = vunpack.c.l.bf16 %v1202
    %s1219 = scalar_lea.vmem [#allocation8], 120
    %v1220 = vld [vmem:[%s1219] sm:$0xff]
    %1221 = vmatpush.msra.mxu0 %v1218
    %1222 = vmatpush.msra.mxu0 %v1217
    %1223 = vmatpush.msra.mxu0 %v1216
    %1224 = vmatpush.msra.mxu0 %v1215
    %1225 = vmatpush.msra.mxu0 %v1214
    %1226 = vmatpush.msra.mxu0 %v1213
    %1227 = vmatpush.msra.mxu0 %v1212
    %1228 = vmatpush.msra.mxu0 %v1211
    %1229 = vmatpush.msra.mxu0 %v1210
    %1230 = vmatpush.msra.mxu0 %v1209
    %1231 = vmatpush.msra.mxu0 %v1208
    %1232 = vmatpush.msra.mxu0 %v1207
    %1233 = vmatpush.msra.mxu0 %v1206
    %1234 = vmatpush.msra.mxu0 %v1205
    %1235 = vmatpush.msra.mxu0 %v1204
    %1236 = vmatpush.msra.mxu0 %v1203
    %1237 = vmatmul.f32.gmra.mxu0 %v1185
    %v1238 = vpop.f32.mrf.mxu0
    %v1239 = vadd.f32 %v1220, %v1238
    %1240 = vdwg.mxu0
    %v1241 = vmax.f32 %v1239, 0.0
    %s1242 = scalar_lea.vmem [#allocation10], 768
    %v1243 = vld [vmem:[%s1242 + $0x8] sm:$0xff]
    %v1244 = vld [vmem:[%s1242 + $0x18] sm:$0xff]
    %v1245 = vld [vmem:[%s1242 + $0x28] sm:$0xff]
    %v1246 = vld [vmem:[%s1242 + $0x38] sm:$0xff]
    %v1247 = vld [vmem:[%s1242 + $0x48] sm:$0xff]
    %v1248 = vld [vmem:[%s1242 + $0x58] sm:$0xff]
    %v1249 = vld [vmem:[%s1242 + $0x68] sm:$0xff]
    %v1250 = vld [vmem:[%s1242 + $0x78] sm:$0xff]
    %v1251 = vld [vmem:[%s1242 + $0x88] sm:$0xff]
    %v1252 = vld [vmem:[%s1242 + $0x98] sm:$0xff]
    %v1253 = vld [vmem:[%s1242 + $0xa8] sm:$0xff]
    %v1254 = vld [vmem:[%s1242 + $0xb8] sm:$0xff]
    %v1255 = vld [vmem:[%s1242 + $0xc8] sm:$0xff]
    %v1256 = vld [vmem:[%s1242 + $0xd8] sm:$0xff]
    %v1257 = vld [vmem:[%s1242 + $0xe8] sm:$0xff]
    %v1258 = vld [vmem:[%s1242 + $0xf8] sm:$0xff]
    %s1259 = scalar_lea.vmem [#allocation11], 48
    %v1260 = vld [vmem:[%s1259 + $0x8] sm:$0xff]
    %1261 = vmatpush.msra.mxu0 %v1258
    %1262 = vmatpush.msra.mxu0 %v1257
    %1263 = vmatpush.msra.mxu0 %v1256
    %1264 = vmatpush.msra.mxu0 %v1255
    %1265 = vmatpush.msra.mxu0 %v1254
    %1266 = vmatpush.msra.mxu0 %v1253
    %1267 = vmatpush.msra.mxu0 %v1252
    %1268 = vmatpush.msra.mxu0 %v1251
    %1269 = vmatpush.msra.mxu0 %v1250
    %1270 = vmatpush.msra.mxu0 %v1249
    %1271 = vmatpush.msra.mxu0 %v1248
    %1272 = vmatpush.msra.mxu0 %v1247
    %1273 = vmatpush.msra.mxu0 %v1246
    %1274 = vmatpush.msra.mxu0 %v1245
    %1275 = vmatpush.msra.mxu0 %v1244
    %1276 = vmatpush.msra.mxu0 %v1243
    %1277 = vmatmul.f32.gmra.mxu0 %v1241
    %v1278 = vpop.f32.mrf.mxu0
    %v1279 = vadd.f32 %v1260, %v1278
    %1280 = vdwg.mxu0
    %v1281 = vadd.f32 %v1017, %v1279
    %1282 = vst [vmem:[#allocation13] sm:$0xff] %v1281
    // Predicated region
    $region50: #{tpu_custom_call.1} parent=1 // pred_check
      _
    $region51: #{tpu_custom_call.1} parent=1 // pred_check_branch
      %1284 = sbr.rel (0) target = $region53
    $region52: #{tpu_custom_call.1} parent=1 // pred_region
      %1286 = vsyncadd [#allocation4], 0
      %s1288 = sshll.u32 [#allocation13], 4
      %s1289 = int_to_ptr.vmem [resolvable:$true] %s1288
      %s1290 = sshll.u32 %s6, 4
      %s1291 = int_to_ptr.hbm [resolvable:$true] %s1290
      %1293 = dma.vmem_to_hbm [thread:$0]  %s1289, 128, %s1291, [#allocation4]
    $region53: #{tpu_custom_call.1} parent=1 // pred_fallthru
      _
    // Predicated region
    $region54: #{tpu_custom_call.1} parent=1 // pred_check
      _
    $region55: #{tpu_custom_call.1} parent=1 // pred_check_branch
      %1295 = sbr.rel (0) target = $region57
    $region56: #{tpu_custom_call.1} parent=1 // pred_region
      %1297 = dma.done [#allocation4], 128
    $region57: #{tpu_custom_call.1} parent=1 // pred_fallthru
      _
    %1298 = vsyncpa [#allocation3], 1
    %1299 = vsyncpa [#allocation6], 1
    %1300 = vsyncpa [#allocation9], 1
    %1301 = vsyncpa [#allocation12], 1
    %1302 = vsyncpa [#allocation4], 1

</llo_original>
